<compile_context>
chip_gen: v5e
topology: v5e:2x2
jax: 0.10.0
libtpu: 0.0.40
codegen_flags: <defaults>
</compile_context>

<pallas_src>
import jax
import jax.numpy as jnp
from jax.experimental import pallas as pl
from jax.experimental.pallas import tpu as pltpu


def _relation_gcn_kernel(
    thorn_r_ref,   # (Bb, C, T, H)  compute dtype
    clone_r_ref,   # (Bb, C, C, H)  compute dtype
    clone_ref,     # (Bb, C, H)     compute dtype
    food_ref,      # (Bb, C, H)     compute dtype
    thorn_m_ref,   # (Bb, 1, T)     f32 (0/1)
    clone_m_ref,   # (Bb, 1, C)     f32 (0/1)
    w_t_ref, b_t_ref,   # (H, H) cd, (1, H) f32
    w_c_ref, b_c_ref,   # (H, H) cd, (1, H) f32
    w_a_ref, b_a_ref,   # (4H, H) cd, (1, H) f32
    out_ref,       # (Bb, C, H)     output dtype
):
    bb, c, t, h = thorn_r_ref.shape

    # ---- thorn branch: ReLU(x @ Wt + bt) * mask_t, then max over thorn axis ----
    x = thorn_r_ref[...].reshape(bb * c * t, h)                     # fat 2-D matmul
    ht = jnp.dot(x, w_t_ref[...], preferred_element_type=jnp.float32)
    ht = jnp.maximum(ht + b_t_ref[...], 0.0)                        # f32 (bb*c*t, h)
    # mask broadcast: (bb,1,t,1) over the (bb,c,t,h) view; max over source axis t
    ht = ht.reshape(bb, c, t, h) * thorn_m_ref[...][:, :, :, None]
    thorn_feat = jnp.max(ht, axis=2)                                # (bb, c, h) f32

    # ---- clone branch: ReLU(y @ Wc + bc) * mask_c', then max over source clones ----
    y = clone_r_ref[...].reshape(bb * c * c, h)
    hc = jnp.dot(y, w_c_ref[...], preferred_element_type=jnp.float32)
    hc = jnp.maximum(hc + b_c_ref[...], 0.0)                        # f32 (bb*c*c, h)
    hc = hc.reshape(bb, c, c, h) * clone_m_ref[...][:, :, :, None]
    clone_feat = jnp.max(hc, axis=2)                                # (bb, c, h) f32

    # ---- aggregation: concat([clone, food, thorn_feat, clone_feat]) @ Wa + ba ----
    # folded into four partial matmuls on row-slices of Wa (no concat relayout).
    cd = w_a_ref.dtype
    cl = clone_ref[...].reshape(bb * c, h)
    fd = food_ref[...].reshape(bb * c, h)
    tf = thorn_feat.reshape(bb * c, h).astype(cd)
    cf = clone_feat.reshape(bb * c, h).astype(cd)
    acc = jnp.dot(cl, w_a_ref[pl.ds(0, h), :], preferred_element_type=jnp.float32)
    acc = acc + jnp.dot(fd, w_a_ref[pl.ds(h, h), :], preferred_element_type=jnp.float32)
    acc = acc + jnp.dot(tf, w_a_ref[pl.ds(2 * h, h), :], preferred_element_type=jnp.float32)
    acc = acc + jnp.dot(cf, w_a_ref[pl.ds(3 * h, h), :], preferred_element_type=jnp.float32)
    out = jnp.maximum(acc + b_a_ref[...], 0.0)
    out_ref[...] = out.reshape(bb, c, h).astype(out_ref.dtype)


def _choose_block_batch(b, c, t, h, in_itemsize, out_itemsize,
                        budget_bytes=6 * 1024 * 1024):
    """Largest batch-block that (a) divides b, (b) keeps a single-buffered set of
    streamed blocks under `budget_bytes` (so 2x-buffered blocks stay well inside
    v7x's 64 MiB VMEM), (c) leaves >= 2 grid steps for pipelining / megacore."""
    per_b = in_itemsize * (c * t * h + c * c * h + 2 * c * h) + out_itemsize * c * h
    cap = min(8, max(1, b // 2))
    bb = 1
    for cand in range(1, cap + 1):
        if b % cand == 0 and cand * per_b <= budget_bytes:
            bb = cand
    return bb


def relation_gcn(food_relation, thorn_relation, clone, clone_relation,
                 thorn_mask, clone_mask, params, *,
                 compute_dtype=jnp.bfloat16, block_batch=None):
    """food_relation: (b,c,H)  thorn_relation: (b,c,t,H)  clone: (b,c,H)
    clone_relation: (b,c,c,H)  thorn_mask: (b,t)  clone_mask: (b,c)
    Returns the updated clone embedding (b, c, H) in clone.dtype."""
    b, c, h = clone.shape
    t = thorn_relation.shape[2]
    assert food_relation.shape == (b, c, h)
    assert thorn_relation.shape == (b, c, t, h)
    assert clone_relation.shape == (b, c, c, h)
    assert thorn_mask.shape == (b, t)
    assert clone_mask.shape == (b, c)

    cd = jnp.dtype(compute_dtype)
    out_dtype = clone.dtype

    # Compute-dtype casts at the HBM boundary (no-ops if the caller already
    # supplies bf16 activations).  Layouts are left untouched — no transposes,
    # no mask expansion.
    thorn_r = thorn_relation.astype(cd)
    clone_r = clone_relation.astype(cd)
    clone_in = clone.astype(cd)
    food_in = food_relation.astype(cd)
    w_t = params["w_thorn"].astype(cd)
    w_c = params["w_clone"].astype(cd)
    w_a = params["w_agg"].astype(cd)
    b_t = params["b_thorn"].astype(jnp.float32)
    b_c = params["b_clone"].astype(jnp.float32)
    b_a = params["b_agg"].astype(jnp.float32)

    # Tiny f32 masks, broadcast inside the kernel.
    thorn_m = thorn_mask.astype(jnp.float32).reshape(b, 1, t)
    clone_m = clone_mask.astype(jnp.float32).reshape(b, 1, c)

    if block_batch is None:
        block_batch = _choose_block_batch(
            b, c, t, h, cd.itemsize, jnp.dtype(out_dtype).itemsize)
    bb = block_batch
    assert b % bb == 0, "block_batch must divide the batch size"
    grid = (b // bb,)

    flops = 2 * h * h * (t * c + c * c + 4 * c) * b
    bytes_accessed = (
        (thorn_r.size + clone_r.size + clone_in.size + food_in.size
         + w_t.size + w_c.size + w_a.size) * cd.itemsize
        + (thorn_m.size + clone_m.size + b_t.size + b_c.size + b_a.size) * 4
        + b * c * h * jnp.dtype(out_dtype).itemsize)

    out = pl.pallas_call(
        _relation_gcn_kernel,
        out_shape=jax.ShapeDtypeStruct((b, c, h), out_dtype),
        grid_spec=pltpu.PrefetchScalarGridSpec(
            num_scalar_prefetch=0,
            grid=grid,
            in_specs=[
                pl.BlockSpec((bb, c, t, h), lambda i: (i, 0, 0, 0)),  # thorn_relation
                pl.BlockSpec((bb, c, c, h), lambda i: (i, 0, 0, 0)),  # clone_relation
                pl.BlockSpec((bb, c, h), lambda i: (i, 0, 0)),        # clone
                pl.BlockSpec((bb, c, h), lambda i: (i, 0, 0)),        # food_relation
                pl.BlockSpec((bb, 1, t), lambda i: (i, 0, 0)),        # thorn_mask
                pl.BlockSpec((bb, 1, c), lambda i: (i, 0, 0)),        # clone_mask
                # Weights / biases: constant block index -> DMA'd once, stay
                # resident in VMEM across the whole grid.
                pl.BlockSpec((h, h), lambda i: (0, 0)),               # Wt
                pl.BlockSpec((1, h), lambda i: (0, 0)),               # bt
                pl.BlockSpec((h, h), lambda i: (0, 0)),               # Wc
                pl.BlockSpec((1, h), lambda i: (0, 0)),               # bc
                pl.BlockSpec((4 * h, h), lambda i: (0, 0)),           # Wa
                pl.BlockSpec((1, h), lambda i: (0, 0)),               # ba
            ],
            out_specs=pl.BlockSpec((bb, c, h), lambda i: (i, 0, 0)),
        ),
        compiler_params=pltpu.CompilerParams(
            dimension_semantics=("parallel",),
            vmem_limit_bytes=48 * 1024 * 1024),
        cost_estimate=pl.CostEstimate(
            flops=int(flops),
            transcendentals=0,
            bytes_accessed=int(bytes_accessed)),
    )(thorn_r, clone_r, clone_in, food_in, thorn_m, clone_m,
      w_t, b_t, w_c, b_c, w_a, b_a)
    return out


def init_params(hidden, key):
    """torch.nn.Linear-style init, weights stored (in_features, out_features)."""
    ks = jax.random.split(key, 6)

    def linear(kw, kb, fin, fout):
        lim = 1.0 / jnp.sqrt(jnp.float32(fin))
        w = jax.random.uniform(kw, (fin, fout), jnp.float32, -lim, lim)
        b = jax.random.uniform(kb, (1, fout), jnp.float32, -lim, lim)
        return w, b

    w_t, b_t = linear(ks[0], ks[1], hidden, hidden)
    w_c, b_c = linear(ks[2], ks[3], hidden, hidden)
    w_a, b_a = linear(ks[4], ks[5], 4 * hidden, hidden)
    return {"w_thorn": w_t, "b_thorn": b_t,
            "w_clone": w_c, "b_clone": b_c,
            "w_agg": w_a, "b_agg": b_a}


def relation_gcn_ref(food, thorn_rel, clone, clone_rel, thorn_mask, clone_mask, params):
    """Pure-JAX f32 reference mirroring the PyTorch forward."""
    relu = lambda v: jnp.maximum(v, 0.0)
    tr = relu(jnp.einsum('bcth,hk->bctk', thorn_rel, params["w_thorn"]) + params["b_thorn"])
    tr = (tr * thorn_mask[:, None, :, None]).max(axis=2)
    cr = relu(jnp.einsum('bcdh,hk->bcdk', clone_rel, params["w_clone"]) + params["b_clone"])
    cr = (cr * clone_mask[:, None, :, None]).max(axis=2)
    agg = jnp.concatenate([clone, food, tr, cr], axis=2)
    return relu(jnp.einsum('bcf,fk->bck', agg, params["w_agg"]) + params["b_agg"])


if __name__ == "__main__":
    key = jax.random.PRNGKey(0)
    k_f, k_t, k_c, k_cr, k_tm, k_cm, k_p = jax.random.split(key, 7)

    # Small shapes consistent with the module: batch=2, clones=16, thorns=8, hidden=32.
    B, C, T, H = 2, 16, 8, 32
    food_relation  = jax.random.normal(k_f, (B, C, H), jnp.float32)
    thorn_relation = jax.random.normal(k_t, (B, C, T, H), jnp.float32)
    clone          = jax.random.normal(k_c, (B, C, H), jnp.float32)
    clone_relation = jax.random.normal(k_cr, (B, C, C, H), jnp.float32)
    thorn_mask = (jax.random.uniform(k_tm, (B, T)) > 0.3).astype(jnp.float32)
    clone_mask = (jax.random.uniform(k_cm, (B, C)) > 0.3).astype(jnp.float32)
    params = init_params(H, k_p)

    ref = relation_gcn_ref(food_relation, thorn_relation, clone, clone_relation,
                           thorn_mask, clone_mask, params)

    # Exact-semantics check: same kernel, f32 compute path.
    out_f32 = relation_gcn(food_relation, thorn_relation, clone, clone_relation,
                           thorn_mask, clone_mask, params,
                           compute_dtype=jnp.float32)
    out_f32 = jax.block_until_ready(out_f32)
    assert out_f32.shape == (B, C, H)
    assert jnp.allclose(out_f32, ref, atol=1e-5, rtol=1e-5), "f32 mismatch vs reference"

    # Performance path (default): bf16 inputs/weights, f32 accumulation.
    out_bf16 = relation_gcn(food_relation, thorn_relation, clone, clone_relation,
                            thorn_mask, clone_mask, params)
    out_bf16 = jax.block_until_ready(out_bf16)
    assert out_bf16.shape == (B, C, H)
    assert jnp.allclose(out_bf16, ref, atol=6e-2, rtol=6e-2), "bf16 mismatch vs reference"

    print("KERNEL_OK")
</pallas_src>

<mosaic_0001>
module attributes {stable_mosaic.version = 11 : i64} {
  func.func @_relation_gcn_kernel(%arg0: i32, %arg1: memref<1x16x8x32xf32, #tpu.memory_space<vmem>>, %arg2: memref<1x16x16x32xf32, #tpu.memory_space<vmem>>, %arg3: memref<1x16x32xf32, #tpu.memory_space<vmem>>, %arg4: memref<1x16x32xf32, #tpu.memory_space<vmem>>, %arg5: memref<1x1x8xf32, #tpu.memory_space<vmem>>, %arg6: memref<1x1x16xf32, #tpu.memory_space<vmem>>, %arg7: memref<32x32xf32, #tpu.memory_space<vmem>>, %arg8: memref<1x32xf32, #tpu.memory_space<vmem>>, %arg9: memref<32x32xf32, #tpu.memory_space<vmem>>, %arg10: memref<1x32xf32, #tpu.memory_space<vmem>>, %arg11: memref<128x32xf32, #tpu.memory_space<vmem>>, %arg12: memref<1x32xf32, #tpu.memory_space<vmem>>, %arg13: memref<1x16x32xf32, #tpu.memory_space<vmem>>) attributes {dimension_semantics = [#tpu.dimension_semantics<parallel>], iteration_bounds = array<i64: 2>, scalar_prefetch = 0 : i64, scratch_operands = 0 : i64, tpu.core_type = #tpu.core_type<tc>, window_params = [{transform_indices = @transform_0, window_bounds = array<i64: 1, 16, 8, 32>}, {transform_indices = @transform_1, window_bounds = array<i64: 1, 16, 16, 32>}, {transform_indices = @transform_2, window_bounds = array<i64: 1, 16, 32>}, {transform_indices = @transform_3, window_bounds = array<i64: 1, 16, 32>}, {transform_indices = @transform_4, window_bounds = array<i64: 1, 1, 8>}, {transform_indices = @transform_5, window_bounds = array<i64: 1, 1, 16>}, {pipeline_mode = #tpu.pipeline_mode<synchronous>, transform_indices = @transform_6, window_bounds = array<i64: 32, 32>}, {pipeline_mode = #tpu.pipeline_mode<synchronous>, transform_indices = @transform_7, window_bounds = array<i64: 1, 32>}, {pipeline_mode = #tpu.pipeline_mode<synchronous>, transform_indices = @transform_8, window_bounds = array<i64: 32, 32>}, {pipeline_mode = #tpu.pipeline_mode<synchronous>, transform_indices = @transform_9, window_bounds = array<i64: 1, 32>}, {pipeline_mode = #tpu.pipeline_mode<synchronous>, transform_indices = @transform_10, window_bounds = array<i64: 128, 32>}, {pipeline_mode = #tpu.pipeline_mode<synchronous>, transform_indices = @transform_11, window_bounds = array<i64: 1, 32>}, {transform_indices = @transform_12, window_bounds = array<i64: 1, 16, 32>}]} {
    %c0 = arith.constant 0 : index
    %c0_0 = arith.constant 0 : index
    %c0_1 = arith.constant 0 : index
    %c0_2 = arith.constant 0 : index
    %0 = vector.load %arg1[%c0, %c0_0, %c0_1, %c0_2] : memref<1x16x8x32xf32, #tpu.memory_space<vmem>>, vector<1x16x8x32xf32>
    %1 = vector.shape_cast %0 : vector<1x16x8x32xf32> to vector<128x32xf32>
    %c0_3 = arith.constant 0 : index
    %c0_4 = arith.constant 0 : index
    %2 = vector.load %arg7[%c0_3, %c0_4] : memref<32x32xf32, #tpu.memory_space<vmem>>, vector<32x32xf32>
    %cst = arith.constant dense<0.000000e+00> : vector<128x32xf32>
    %3 = tpu.matmul %1, %2, %cst {dimension_numbers = #tpu.dot_dimension_numbers<[1], [0], [0], [1], [0, 0, 1, 1], [], []>} : vector<128x32xf32>, vector<32x32xf32>, vector<128x32xf32> -> vector<128x32xf32>
    %c0_5 = arith.constant 0 : index
    %c0_6 = arith.constant 0 : index
    %4 = vector.load %arg8[%c0_5, %c0_6] : memref<1x32xf32, #tpu.memory_space<vmem>>, vector<1x32xf32>
    %5 = vector.broadcast %4 : vector<1x32xf32> to vector<128x32xf32>
    %6 = arith.addf %3, %5 : vector<128x32xf32>
    %cst_7 = arith.constant 0.000000e+00 : f32
    %7 = vector.broadcast %cst_7 : f32 to vector<128x32xf32>
    %8 = arith.maximumf %6, %7 : vector<128x32xf32>
    %9 = vector.shape_cast %8 : vector<128x32xf32> to vector<1x16x8x32xf32>
    %c0_8 = arith.constant 0 : index
    %c0_9 = arith.constant 0 : index
    %c0_10 = arith.constant 0 : index
    %10 = vector.load %arg5[%c0_8, %c0_9, %c0_10] : memref<1x1x8xf32, #tpu.memory_space<vmem>>, vector<1x1x8xf32>
    %11 = vector.shape_cast %10 : vector<1x1x8xf32> to vector<1x1x8x1xf32>
    %12 = vector.broadcast %11 : vector<1x1x8x1xf32> to vector<1x16x8x32xf32>
    %13 = arith.mulf %9, %12 : vector<1x16x8x32xf32>
    %cst_11 = arith.constant dense<0xFF800000> : vector<1x16x32xf32>
    %14 = vector.multi_reduction <maximumf>, %13, %cst_11 [2] : vector<1x16x8x32xf32> to vector<1x16x32xf32>
    %c0_12 = arith.constant 0 : index
    %c0_13 = arith.constant 0 : index
    %c0_14 = arith.constant 0 : index
    %c0_15 = arith.constant 0 : index
    %15 = vector.load %arg2[%c0_12, %c0_13, %c0_14, %c0_15] : memref<1x16x16x32xf32, #tpu.memory_space<vmem>>, vector<1x16x16x32xf32>
    %16 = vector.shape_cast %15 : vector<1x16x16x32xf32> to vector<256x32xf32>
    %c0_16 = arith.constant 0 : index
    %c0_17 = arith.constant 0 : index
    %17 = vector.load %arg9[%c0_16, %c0_17] : memref<32x32xf32, #tpu.memory_space<vmem>>, vector<32x32xf32>
    %cst_18 = arith.constant dense<0.000000e+00> : vector<256x32xf32>
    %18 = tpu.matmul %16, %17, %cst_18 {dimension_numbers = #tpu.dot_dimension_numbers<[1], [0], [0], [1], [0, 0, 1, 1], [], []>} : vector<256x32xf32>, vector<32x32xf32>, vector<256x32xf32> -> vector<256x32xf32>
    %c0_19 = arith.constant 0 : index
    %c0_20 = arith.constant 0 : index
    %19 = vector.load %arg10[%c0_19, %c0_20] : memref<1x32xf32, #tpu.memory_space<vmem>>, vector<1x32xf32>
    %20 = vector.broadcast %19 : vector<1x32xf32> to vector<256x32xf32>
    %21 = arith.addf %18, %20 : vector<256x32xf32>
    %cst_21 = arith.constant 0.000000e+00 : f32
    %22 = vector.broadcast %cst_21 : f32 to vector<256x32xf32>
    %23 = arith.maximumf %21, %22 : vector<256x32xf32>
    %24 = vector.shape_cast %23 : vector<256x32xf32> to vector<1x16x16x32xf32>
    %c0_22 = arith.constant 0 : index
    %c0_23 = arith.constant 0 : index
    %c0_24 = arith.constant 0 : index
    %25 = vector.load %arg6[%c0_22, %c0_23, %c0_24] : memref<1x1x16xf32, #tpu.memory_space<vmem>>, vector<1x1x16xf32>
    %26 = vector.shape_cast %25 : vector<1x1x16xf32> to vector<1x1x16x1xf32>
    %27 = vector.broadcast %26 : vector<1x1x16x1xf32> to vector<1x16x16x32xf32>
    %28 = arith.mulf %24, %27 : vector<1x16x16x32xf32>
    %cst_25 = arith.constant dense<0xFF800000> : vector<1x16x32xf32>
    %29 = vector.multi_reduction <maximumf>, %28, %cst_25 [2] : vector<1x16x16x32xf32> to vector<1x16x32xf32>
    %c0_26 = arith.constant 0 : index
    %c0_27 = arith.constant 0 : index
    %c0_28 = arith.constant 0 : index
    %30 = vector.load %arg3[%c0_26, %c0_27, %c0_28] : memref<1x16x32xf32, #tpu.memory_space<vmem>>, vector<1x16x32xf32>
    %31 = vector.shape_cast %30 : vector<1x16x32xf32> to vector<16x32xf32>
    %c0_29 = arith.constant 0 : index
    %c0_30 = arith.constant 0 : index
    %c0_31 = arith.constant 0 : index
    %32 = vector.load %arg4[%c0_29, %c0_30, %c0_31] : memref<1x16x32xf32, #tpu.memory_space<vmem>>, vector<1x16x32xf32>
    %33 = vector.shape_cast %32 : vector<1x16x32xf32> to vector<16x32xf32>
    %34 = vector.shape_cast %14 : vector<1x16x32xf32> to vector<16x32xf32>
    %35 = vector.shape_cast %29 : vector<1x16x32xf32> to vector<16x32xf32>
    %c0_32 = arith.constant 0 : index
    %c0_33 = arith.constant 0 : index
    %36 = vector.load %arg11[%c0_32, %c0_33] : memref<128x32xf32, #tpu.memory_space<vmem>>, vector<32x32xf32>
    %cst_34 = arith.constant dense<0.000000e+00> : vector<16x32xf32>
    %37 = tpu.matmul %31, %36, %cst_34 {dimension_numbers = #tpu.dot_dimension_numbers<[1], [0], [0], [1], [0, 0, 1, 1], [], []>} : vector<16x32xf32>, vector<32x32xf32>, vector<16x32xf32> -> vector<16x32xf32>
    %c32 = arith.constant 32 : index
    %c0_35 = arith.constant 0 : index
    %38 = vector.load %arg11[%c32, %c0_35] : memref<128x32xf32, #tpu.memory_space<vmem>>, vector<32x32xf32>
    %cst_36 = arith.constant dense<0.000000e+00> : vector<16x32xf32>
    %39 = tpu.matmul %33, %38, %cst_36 {dimension_numbers = #tpu.dot_dimension_numbers<[1], [0], [0], [1], [0, 0, 1, 1], [], []>} : vector<16x32xf32>, vector<32x32xf32>, vector<16x32xf32> -> vector<16x32xf32>
    %40 = arith.addf %37, %39 : vector<16x32xf32>
    %c64 = arith.constant 64 : index
    %c0_37 = arith.constant 0 : index
    %41 = vector.load %arg11[%c64, %c0_37] : memref<128x32xf32, #tpu.memory_space<vmem>>, vector<32x32xf32>
    %cst_38 = arith.constant dense<0.000000e+00> : vector<16x32xf32>
    %42 = tpu.matmul %34, %41, %cst_38 {dimension_numbers = #tpu.dot_dimension_numbers<[1], [0], [0], [1], [0, 0, 1, 1], [], []>} : vector<16x32xf32>, vector<32x32xf32>, vector<16x32xf32> -> vector<16x32xf32>
    %43 = arith.addf %40, %42 : vector<16x32xf32>
    %c96 = arith.constant 96 : index
    %c0_39 = arith.constant 0 : index
    %44 = vector.load %arg11[%c96, %c0_39] : memref<128x32xf32, #tpu.memory_space<vmem>>, vector<32x32xf32>
    %cst_40 = arith.constant dense<0.000000e+00> : vector<16x32xf32>
    %45 = tpu.matmul %35, %44, %cst_40 {dimension_numbers = #tpu.dot_dimension_numbers<[1], [0], [0], [1], [0, 0, 1, 1], [], []>} : vector<16x32xf32>, vector<32x32xf32>, vector<16x32xf32> -> vector<16x32xf32>
    %46 = arith.addf %43, %45 : vector<16x32xf32>
    %c0_41 = arith.constant 0 : index
    %c0_42 = arith.constant 0 : index
    %47 = vector.load %arg12[%c0_41, %c0_42] : memref<1x32xf32, #tpu.memory_space<vmem>>, vector<1x32xf32>
    %48 = vector.broadcast %47 : vector<1x32xf32> to vector<16x32xf32>
    %49 = arith.addf %46, %48 : vector<16x32xf32>
    %cst_43 = arith.constant 0.000000e+00 : f32
    %50 = vector.broadcast %cst_43 : f32 to vector<16x32xf32>
    %51 = arith.maximumf %49, %50 : vector<16x32xf32>
    %52 = vector.shape_cast %51 : vector<16x32xf32> to vector<1x16x32xf32>
    %c0_44 = arith.constant 0 : index
    %c0_45 = arith.constant 0 : index
    %c0_46 = arith.constant 0 : index
    %53 = vector.load %arg13[%c0_44, %c0_45, %c0_46] : memref<1x16x32xf32, #tpu.memory_space<vmem>>, vector<1x16x32xf32>
    tpu.vector_store %arg13[%c0_44, %c0_45, %c0_46], %52 {strides = array<i32>} : memref<1x16x32xf32, #tpu.memory_space<vmem>>, vector<1x16x32xf32>,
    return
  }
  func.func @transform_0(%arg0: i32) -> (i32, i32, i32, i32) {
    %c0_i32 = arith.constant 0 : i32
    %c0_i32_0 = arith.constant 0 : i32
    %c0_i32_1 = arith.constant 0 : i32
    %c0_i32_2 = arith.constant 0 : i32
    return %arg0, %c0_i32, %c0_i32_0, %c0_i32_1 : i32, i32, i32, i32
  }
  func.func @transform_1(%arg0: i32) -> (i32, i32, i32, i32) {
    %c0_i32 = arith.constant 0 : i32
    %c0_i32_0 = arith.constant 0 : i32
    %c0_i32_1 = arith.constant 0 : i32
    %c0_i32_2 = arith.constant 0 : i32
    return %arg0, %c0_i32, %c0_i32_0, %c0_i32_1 : i32, i32, i32, i32
  }
  func.func @transform_2(%arg0: i32) -> (i32, i32, i32) {
    %c0_i32 = arith.constant 0 : i32
    %c0_i32_0 = arith.constant 0 : i32
    %c0_i32_1 = arith.constant 0 : i32
    return %arg0, %c0_i32, %c0_i32_0 : i32, i32, i32
  }
  func.func @transform_3(%arg0: i32) -> (i32, i32, i32) {
    %c0_i32 = arith.constant 0 : i32
    %c0_i32_0 = arith.constant 0 : i32
    %c0_i32_1 = arith.constant 0 : i32
    return %arg0, %c0_i32, %c0_i32_0 : i32, i32, i32
  }
  func.func @transform_4(%arg0: i32) -> (i32, i32, i32) {
    %c0_i32 = arith.constant 0 : i32
    %c0_i32_0 = arith.constant 0 : i32
    %c0_i32_1 = arith.constant 0 : i32
    return %arg0, %c0_i32, %c0_i32_0 : i32, i32, i32
  }
  func.func @transform_5(%arg0: i32) -> (i32, i32, i32) {
    %c0_i32 = arith.constant 0 : i32
    %c0_i32_0 = arith.constant 0 : i32
    %c0_i32_1 = arith.constant 0 : i32
    return %arg0, %c0_i32, %c0_i32_0 : i32, i32, i32
  }
  func.func @transform_6(%arg0: i32) -> (i32, i32) {
    %c0_i32 = arith.constant 0 : i32
    %c0_i32_0 = arith.constant 0 : i32
    %c0_i32_1 = arith.constant 0 : i32
    return %c0_i32, %c0_i32_0 : i32, i32
  }
  func.func @transform_7(%arg0: i32) -> (i32, i32) {
    %c0_i32 = arith.constant 0 : i32
    %c0_i32_0 = arith.constant 0 : i32
    %c0_i32_1 = arith.constant 0 : i32
    return %c0_i32, %c0_i32_0 : i32, i32
  }
  func.func @transform_8(%arg0: i32) -> (i32, i32) {
    %c0_i32 = arith.constant 0 : i32
    %c0_i32_0 = arith.constant 0 : i32
    %c0_i32_1 = arith.constant 0 : i32
    return %c0_i32, %c0_i32_0 : i32, i32
  }
  func.func @transform_9(%arg0: i32) -> (i32, i32) {
    %c0_i32 = arith.constant 0 : i32
    %c0_i32_0 = arith.constant 0 : i32
    %c0_i32_1 = arith.constant 0 : i32
    return %c0_i32, %c0_i32_0 : i32, i32
  }
  func.func @transform_10(%arg0: i32) -> (i32, i32) {
    %c0_i32 = arith.constant 0 : i32
    %c0_i32_0 = arith.constant 0 : i32
    %c0_i32_1 = arith.constant 0 : i32
    return %c0_i32, %c0_i32_0 : i32, i32
  }
  func.func @transform_11(%arg0: i32) -> (i32, i32) {
    %c0_i32 = arith.constant 0 : i32
    %c0_i32_0 = arith.constant 0 : i32
    %c0_i32_1 = arith.constant 0 : i32
    return %c0_i32, %c0_i32_0 : i32, i32
  }
  func.func @transform_12(%arg0: i32) -> (i32, i32, i32) {
    %c0_i32 = arith.constant 0 : i32
    %c0_i32_0 = arith.constant 0 : i32
    %c0_i32_1 = arith.constant 0 : i32
    return %arg0, %c0_i32, %c0_i32_0 : i32, i32, i32
  }
}

</mosaic_0001>

<llo_original>
// kernel: tpu_custom_call.1
$region0: #{tpu_custom_call.1}
  #allocation0 [shape = 'u32[]', space=smem, size = 0x4, offset = 0x4, fixed_abs, tag = 'smem constant byte address 0x4 - core index']
  #allocation1 [shape = 'u32[72,128]{1,0:T(1,128)}', space=vmem, size = 0x9000, scoped, tag = 'internal scratch']
  %s0 = inlined_call_operand.hbm [shape: f32[2,16,8,32], index: 0, kind: input, shape index: {}]
  %s1 = inlined_call_operand.hbm [shape: f32[2,16,16,32], index: 1, kind: input, shape index: {}]
  %s2 = inlined_call_operand.vmem [shape: f32[2,16,32], index: 2, kind: input, shape index: {}]
  %s3 = inlined_call_operand.vmem [shape: f32[2,16,32], index: 3, kind: input, shape index: {}]
  %s4 = inlined_call_operand.vmem [shape: f32[2,1,8], index: 4, kind: input, shape index: {}]
  %s5 = inlined_call_operand.vmem [shape: f32[2,1,16], index: 5, kind: input, shape index: {}]
  %s6 = inlined_call_operand.vmem [shape: f32[32,32], index: 6, kind: input, shape index: {}]
  %s7 = inlined_call_operand.vmem [shape: f32[1,32], index: 7, kind: input, shape index: {}]
  %s8 = inlined_call_operand.vmem [shape: f32[32,32], index: 8, kind: input, shape index: {}]
  %s9 = inlined_call_operand.vmem [shape: f32[1,32], index: 9, kind: input, shape index: {}]
  %s10 = inlined_call_operand.vmem [shape: f32[128,32], index: 10, kind: input, shape index: {}]
  %s11 = inlined_call_operand.vmem [shape: f32[1,32], index: 11, kind: input, shape index: {}]
  %s12 = inlined_call_operand.hbm [shape: f32[2,16,32], index: 12, kind: output, shape index: {}]
  %s13 = sld [smem:[#allocation0]]
  $region89: #{tpu_custom_call.1} parent=0
    _
  %s15 = ssub.s32 1, %s13
  %s16 = scalar_select 0, %s15, %s13
  $region1: #{tpu_custom_call.1} parent=0
    #allocation2 [shape = 'u8[131072]{0}', space=vmem, size = 0x20000, scoped, tag = 'input window, operand 0']
    #allocation3 [shape = 's32[2]{0}', space=sflag, size = 0x8, scoped, tag = 'scoped memory for tpu_custom_call.1']
    #allocation4 [shape = 's32[2]{0}', space=sflag, size = 0x8, scoped, tag = 'scoped memory for tpu_custom_call.1']
    #allocation5 [shape = 'u8[262144]{0}', space=vmem, size = 0x40000, scoped, tag = 'input window, operand 1']
    #allocation6 [shape = 's32[2]{0}', space=sflag, size = 0x8, scoped, tag = 'scoped memory for tpu_custom_call.1']
    #allocation7 [shape = 'u8[16384]{0}', space=vmem, size = 0x4000, scoped, tag = 'output window, operand 0']
    %17 = vsyncpa [#allocation3], 0
    %s18 = scalar_lea.sflag [#allocation3], 1
    %19 = vsyncpa %s18, 0
    %20 = vsyncpa [#allocation6], 0
    %s21 = scalar_lea.sflag [#allocation6], 1
    %22 = vsyncpa %s21, 0
    %23 = vsyncpa [#allocation4], 0
    %s24 = scalar_lea.sflag [#allocation4], 1
    %25 = vsyncpa %s24, 0
    loop: start=0, step=1, limit=4
    $region2: #{tpu_custom_call.1} parent=1 // loop_pre_header
      _
    $region3: #{tpu_custom_call.1} parent=1 // loop_header
      %s27 = sphi 0, %s31
      %p28 = scmp.ge.s32.totalorder %s27, 4
      %s37 = sphi 0, %s39
      %s40 = sphi 0, %s37
      %s41 = sphi 0, %s40
      %s57 = sphi 0, %s41
      %s63 = sphi 0, %s65
      %s66 = sphi 0, %s63
      %s67 = sphi 0, %s66
      %s83 = sphi 0, %s67
      %s89 = sphi 0, %s91
      %s92 = sphi 0, %s89
      %s93 = sphi 0, %s92
      %s109 = sphi 0, %s93
      %s115 = sphi 0, %s117
      %s118 = sphi 0, %s115
      %s119 = sphi 0, %s118
      %s135 = sphi 0, %s119
      %s141 = sphi 0, %s143
      %s144 = sphi 0, %s141
      %s145 = sphi 0, %s144
      %s161 = sphi 0, %s145
      %s167 = sphi 0, %s169
      %s170 = sphi 0, %s167
      %s171 = sphi 0, %s170
      %s187 = sphi 0, %s171
      %s191 = sphi 0, %s191
      %s193 = sphi 0, %s191
      %s194 = sphi 0, %s193
      %s208 = sphi 0, %s194
      %s212 = sphi 0, %s212
      %s214 = sphi 0, %s212
      %s215 = sphi 0, %s214
      %s229 = sphi 0, %s215
      %s233 = sphi 0, %s233
      %s235 = sphi 0, %s233
      %s236 = sphi 0, %s235
      %s250 = sphi 0, %s236
      %s254 = sphi 0, %s254
      %s256 = sphi 0, %s254
      %s257 = sphi 0, %s256
      %s271 = sphi 0, %s257
      %s275 = sphi 0, %s275
      %s277 = sphi 0, %s275
      %s278 = sphi 0, %s277
      %s292 = sphi 0, %s278
      %s296 = sphi 0, %s296
      %s298 = sphi 0, %s296
      %s299 = sphi 0, %s298
      %s313 = sphi 0, %s299
      %s319 = sphi 0, %s321
      %s322 = sphi 0, %s319
      %s323 = sphi 0, %s322
      %s339 = sphi 0, %s323
    $region4: #{tpu_custom_call.1} parent=1 // loop_header_branch
      %30 = sbr.rel (%p28) target = $region8
    $region5: #{tpu_custom_call.1} parent=1 // loop_body
      %s32 = ssub.s32 %s27, 1
      %s33 = ssub.s32 %s27, 2
      %s34 = sadd.s32 %s27, 1
      %s35 = ssub.s32 %s27, %s34
      %p36 = scmp.eq.s32.totalorder %s35, 0
      %s38 = sadd.s32 %s37, 1
      %s39 = scalar_select %p36, %s37, %s38
      %p42 = pneg %p36
      %p43 = scmp.eq.s32.totalorder %s27, 1
      %p44 = por %p42, %p43
      %p45 = scmp.ne.s32.totalorder %s37, %s40
      %p46 = scmp.eq.s32.totalorder %s27, 0
      %p47 = por %p45, %p46
      %p48 = scmp.ne.s32.totalorder %s37, %s40
      %p49 = scmp.eq.s32.totalorder %s32, 1
      %p50 = por %p48, %p49
      %p51 = scmp.ne.s32.totalorder %s40, %s41
      %p52 = scmp.eq.s32.totalorder %s32, 0
      %p53 = por %p51, %p52
      %p54 = scmp.ne.s32.totalorder %s40, %s41
      %p55 = scmp.eq.s32.totalorder %s33, 1
      %p56 = por %p54, %p55
      %p58 = scmp.ne.s32.totalorder %s41, %s57
      %p59 = scmp.eq.s32.totalorder %s33, 0
      %p60 = por %p58, %p59
      %s61 = ssub.s32 %s27, %s34
      %p62 = scmp.eq.s32.totalorder %s61, 0
      %s64 = sadd.s32 %s63, 1
      %s65 = scalar_select %p62, %s63, %s64
      %p68 = pneg %p62
      %p69 = scmp.eq.s32.totalorder %s27, 1
      %p70 = por %p68, %p69
      %p71 = scmp.ne.s32.totalorder %s63, %s66
      %p72 = scmp.eq.s32.totalorder %s27, 0
      %p73 = por %p71, %p72
      %p74 = scmp.ne.s32.totalorder %s63, %s66
      %p75 = scmp.eq.s32.totalorder %s32, 1
      %p76 = por %p74, %p75
      %p77 = scmp.ne.s32.totalorder %s66, %s67
      %p78 = scmp.eq.s32.totalorder %s32, 0
      %p79 = por %p77, %p78
      %p80 = scmp.ne.s32.totalorder %s66, %s67
      %p81 = scmp.eq.s32.totalorder %s33, 1
      %p82 = por %p80, %p81
      %p84 = scmp.ne.s32.totalorder %s67, %s83
      %p85 = scmp.eq.s32.totalorder %s33, 0
      %p86 = por %p84, %p85
      %s87 = ssub.s32 %s27, %s34
      %p88 = scmp.eq.s32.totalorder %s87, 0
      %s90 = sadd.s32 %s89, 1
      %s91 = scalar_select %p88, %s89, %s90
      %p94 = pneg %p88
      %p95 = scmp.eq.s32.totalorder %s27, 1
      %p96 = por %p94, %p95
      %p97 = scmp.ne.s32.totalorder %s89, %s92
      %p98 = scmp.eq.s32.totalorder %s27, 0
      %p99 = por %p97, %p98
      %p100 = scmp.ne.s32.totalorder %s89, %s92
      %p101 = scmp.eq.s32.totalorder %s32, 1
      %p102 = por %p100, %p101
      %p103 = scmp.ne.s32.totalorder %s92, %s93
      %p104 = scmp.eq.s32.totalorder %s32, 0
      %p105 = por %p103, %p104
      %p106 = scmp.ne.s32.totalorder %s92, %s93
      %p107 = scmp.eq.s32.totalorder %s33, 1
      %p108 = por %p106, %p107
      %p110 = scmp.ne.s32.totalorder %s93, %s109
      %p111 = scmp.eq.s32.totalorder %s33, 0
      %p112 = por %p110, %p111
      %s113 = ssub.s32 %s27, %s34
      %p114 = scmp.eq.s32.totalorder %s113, 0
      %s116 = sadd.s32 %s115, 1
      %s117 = scalar_select %p114, %s115, %s116
      %p120 = pneg %p114
      %p121 = scmp.eq.s32.totalorder %s27, 1
      %p122 = por %p120, %p121
      %p123 = scmp.ne.s32.totalorder %s115, %s118
      %p124 = scmp.eq.s32.totalorder %s27, 0
      %p125 = por %p123, %p124
      %p126 = scmp.ne.s32.totalorder %s115, %s118
      %p127 = scmp.eq.s32.totalorder %s32, 1
      %p128 = por %p126, %p127
      %p129 = scmp.ne.s32.totalorder %s118, %s119
      %p130 = scmp.eq.s32.totalorder %s32, 0
      %p131 = por %p129, %p130
      %p132 = scmp.ne.s32.totalorder %s118, %s119
      %p133 = scmp.eq.s32.totalorder %s33, 1
      %p134 = por %p132, %p133
      %p136 = scmp.ne.s32.totalorder %s119, %s135
      %p137 = scmp.eq.s32.totalorder %s33, 0
      %p138 = por %p136, %p137
      %s139 = ssub.s32 %s27, %s34
      %p140 = scmp.eq.s32.totalorder %s139, 0
      %s142 = sadd.s32 %s141, 1
      %s143 = scalar_select %p140, %s141, %s142
      %p146 = pneg %p140
      %p147 = scmp.eq.s32.totalorder %s27, 1
      %p148 = por %p146, %p147
      %p149 = scmp.ne.s32.totalorder %s141, %s144
      %p150 = scmp.eq.s32.totalorder %s27, 0
      %p151 = por %p149, %p150
      %p152 = scmp.ne.s32.totalorder %s141, %s144
      %p153 = scmp.eq.s32.totalorder %s32, 1
      %p154 = por %p152, %p153
      %p155 = scmp.ne.s32.totalorder %s144, %s145
      %p156 = scmp.eq.s32.totalorder %s32, 0
      %p157 = por %p155, %p156
      %p158 = scmp.ne.s32.totalorder %s144, %s145
      %p159 = scmp.eq.s32.totalorder %s33, 1
      %p160 = por %p158, %p159
      %p162 = scmp.ne.s32.totalorder %s145, %s161
      %p163 = scmp.eq.s32.totalorder %s33, 0
      %p164 = por %p162, %p163
      %s165 = ssub.s32 %s27, %s34
      %p166 = scmp.eq.s32.totalorder %s165, 0
      %s168 = sadd.s32 %s167, 1
      %s169 = scalar_select %p166, %s167, %s168
      %p172 = pneg %p166
      %p173 = scmp.eq.s32.totalorder %s27, 1
      %p174 = por %p172, %p173
      %p175 = scmp.ne.s32.totalorder %s167, %s170
      %p176 = scmp.eq.s32.totalorder %s27, 0
      %p177 = por %p175, %p176
      %p178 = scmp.ne.s32.totalorder %s167, %s170
      %p179 = scmp.eq.s32.totalorder %s32, 1
      %p180 = por %p178, %p179
      %p181 = scmp.ne.s32.totalorder %s170, %s171
      %p182 = scmp.eq.s32.totalorder %s32, 0
      %p183 = por %p181, %p182
      %p184 = scmp.ne.s32.totalorder %s170, %s171
      %p185 = scmp.eq.s32.totalorder %s33, 1
      %p186 = por %p184, %p185
      %p188 = scmp.ne.s32.totalorder %s171, %s187
      %p189 = scmp.eq.s32.totalorder %s33, 0
      %p190 = por %p188, %p189
      %s192 = sadd.s32 %s191, 1
      %p195 = scmp.eq.s32.totalorder %s27, 1
      %p196 = scmp.ne.s32.totalorder %s191, %s193
      %p197 = scmp.eq.s32.totalorder %s27, 0
      %p198 = por %p196, %p197
      %p199 = scmp.ne.s32.totalorder %s191, %s193
      %p200 = scmp.eq.s32.totalorder %s32, 1
      %p201 = por %p199, %p200
      %p202 = scmp.ne.s32.totalorder %s193, %s194
      %p203 = scmp.eq.s32.totalorder %s32, 0
      %p204 = por %p202, %p203
      %p205 = scmp.ne.s32.totalorder %s193, %s194
      %p206 = scmp.eq.s32.totalorder %s33, 1
      %p207 = por %p205, %p206
      %p209 = scmp.ne.s32.totalorder %s194, %s208
      %p210 = scmp.eq.s32.totalorder %s33, 0
      %p211 = por %p209, %p210
      %s213 = sadd.s32 %s212, 1
      %p216 = scmp.eq.s32.totalorder %s27, 1
      %p217 = scmp.ne.s32.totalorder %s212, %s214
      %p218 = scmp.eq.s32.totalorder %s27, 0
      %p219 = por %p217, %p218
      %p220 = scmp.ne.s32.totalorder %s212, %s214
      %p221 = scmp.eq.s32.totalorder %s32, 1
      %p222 = por %p220, %p221
      %p223 = scmp.ne.s32.totalorder %s214, %s215
      %p224 = scmp.eq.s32.totalorder %s32, 0
      %p225 = por %p223, %p224
      %p226 = scmp.ne.s32.totalorder %s214, %s215
      %p227 = scmp.eq.s32.totalorder %s33, 1
      %p228 = por %p226, %p227
      %p230 = scmp.ne.s32.totalorder %s215, %s229
      %p231 = scmp.eq.s32.totalorder %s33, 0
      %p232 = por %p230, %p231
      %s234 = sadd.s32 %s233, 1
      %p237 = scmp.eq.s32.totalorder %s27, 1
      %p238 = scmp.ne.s32.totalorder %s233, %s235
      %p239 = scmp.eq.s32.totalorder %s27, 0
      %p240 = por %p238, %p239
      %p241 = scmp.ne.s32.totalorder %s233, %s235
      %p242 = scmp.eq.s32.totalorder %s32, 1
      %p243 = por %p241, %p242
      %p244 = scmp.ne.s32.totalorder %s235, %s236
      %p245 = scmp.eq.s32.totalorder %s32, 0
      %p246 = por %p244, %p245
      %p247 = scmp.ne.s32.totalorder %s235, %s236
      %p248 = scmp.eq.s32.totalorder %s33, 1
      %p249 = por %p247, %p248
      %p251 = scmp.ne.s32.totalorder %s236, %s250
      %p252 = scmp.eq.s32.totalorder %s33, 0
      %p253 = por %p251, %p252
      %s255 = sadd.s32 %s254, 1
      %p258 = scmp.eq.s32.totalorder %s27, 1
      %p259 = scmp.ne.s32.totalorder %s254, %s256
      %p260 = scmp.eq.s32.totalorder %s27, 0
      %p261 = por %p259, %p260
      %p262 = scmp.ne.s32.totalorder %s254, %s256
      %p263 = scmp.eq.s32.totalorder %s32, 1
      %p264 = por %p262, %p263
      %p265 = scmp.ne.s32.totalorder %s256, %s257
      %p266 = scmp.eq.s32.totalorder %s32, 0
      %p267 = por %p265, %p266
      %p268 = scmp.ne.s32.totalorder %s256, %s257
      %p269 = scmp.eq.s32.totalorder %s33, 1
      %p270 = por %p268, %p269
      %p272 = scmp.ne.s32.totalorder %s257, %s271
      %p273 = scmp.eq.s32.totalorder %s33, 0
      %p274 = por %p272, %p273
      %s276 = sadd.s32 %s275, 1
      %p279 = scmp.eq.s32.totalorder %s27, 1
      %p280 = scmp.ne.s32.totalorder %s275, %s277
      %p281 = scmp.eq.s32.totalorder %s27, 0
      %p282 = por %p280, %p281
      %p283 = scmp.ne.s32.totalorder %s275, %s277
      %p284 = scmp.eq.s32.totalorder %s32, 1
      %p285 = por %p283, %p284
      %p286 = scmp.ne.s32.totalorder %s277, %s278
      %p287 = scmp.eq.s32.totalorder %s32, 0
      %p288 = por %p286, %p287
      %p289 = scmp.ne.s32.totalorder %s277, %s278
      %p290 = scmp.eq.s32.totalorder %s33, 1
      %p291 = por %p289, %p290
      %p293 = scmp.ne.s32.totalorder %s278, %s292
      %p294 = scmp.eq.s32.totalorder %s33, 0
      %p295 = por %p293, %p294
      %s297 = sadd.s32 %s296, 1
      %p300 = scmp.eq.s32.totalorder %s27, 1
      %p301 = scmp.ne.s32.totalorder %s296, %s298
      %p302 = scmp.eq.s32.totalorder %s27, 0
      %p303 = por %p301, %p302
      %p304 = scmp.ne.s32.totalorder %s296, %s298
      %p305 = scmp.eq.s32.totalorder %s32, 1
      %p306 = por %p304, %p305
      %p307 = scmp.ne.s32.totalorder %s298, %s299
      %p308 = scmp.eq.s32.totalorder %s32, 0
      %p309 = por %p307, %p308
      %p310 = scmp.ne.s32.totalorder %s298, %s299
      %p311 = scmp.eq.s32.totalorder %s33, 1
      %p312 = por %p310, %p311
      %p314 = scmp.ne.s32.totalorder %s299, %s313
      %p315 = scmp.eq.s32.totalorder %s33, 0
      %p316 = por %p314, %p315
      %s317 = ssub.s32 %s27, %s34
      %p318 = scmp.eq.s32.totalorder %s317, 0
      %s320 = sadd.s32 %s319, 1
      %s321 = scalar_select %p318, %s319, %s320
      %p324 = pneg %p318
      %p325 = scmp.eq.s32.totalorder %s27, 1
      %p326 = por %p324, %p325
      %p327 = scmp.ne.s32.totalorder %s319, %s322
      %p328 = scmp.eq.s32.totalorder %s27, 0
      %p329 = por %p327, %p328
      %p330 = scmp.ne.s32.totalorder %s319, %s322
      %p331 = scmp.eq.s32.totalorder %s32, 1
      %p332 = por %p330, %p331
      %p333 = scmp.ne.s32.totalorder %s322, %s323
      %p334 = scmp.eq.s32.totalorder %s32, 0
      %p335 = por %p333, %p334
      %p336 = scmp.ne.s32.totalorder %s322, %s323
      %p337 = scmp.eq.s32.totalorder %s33, 1
      %p338 = por %p336, %p337
      %p340 = scmp.ne.s32.totalorder %s323, %s339
      %p341 = scmp.eq.s32.totalorder %s33, 0
      %p342 = por %p340, %p341
      %p343 = scmp.le.s32.totalorder 1, %s27
      %p344 = scmp.lt.s32.totalorder %s27, 3
      %p345 = pnand %p343, %p344
      %p346 = pneg %p345
      // Predicated region
      $region9: #{tpu_custom_call.1} parent=5 // pred_check
        _
      $region10: #{tpu_custom_call.1} parent=5 // pred_check_branch
        %348 = sbr.rel (%p345) target = $region12
      $region11: #{tpu_custom_call.1} parent=5 // pred_region
        %s349 = ssub.s32 %s27, 1
        // Predicated region
        $region13: #{tpu_custom_call.1} parent=11 // pred_check
          %p350 = pneg %p204
        $region14: #{tpu_custom_call.1} parent=11 // pred_check_branch
          %352 = sbr.rel (%p350) target = $region16
        $region15: #{tpu_custom_call.1} parent=11 // pred_region
          _
        $region16: #{tpu_custom_call.1} parent=11 // pred_fallthru
          _
        // Predicated region
        $region17: #{tpu_custom_call.1} parent=11 // pred_check
          %p353 = pneg %p225
        $region18: #{tpu_custom_call.1} parent=11 // pred_check_branch
          %355 = sbr.rel (%p353) target = $region20
        $region19: #{tpu_custom_call.1} parent=11 // pred_region
          _
        $region20: #{tpu_custom_call.1} parent=11 // pred_fallthru
          _
        // Predicated region
        $region21: #{tpu_custom_call.1} parent=11 // pred_check
          %p356 = pneg %p246
        $region22: #{tpu_custom_call.1} parent=11 // pred_check_branch
          %358 = sbr.rel (%p356) target = $region24
        $region23: #{tpu_custom_call.1} parent=11 // pred_region
          _
        $region24: #{tpu_custom_call.1} parent=11 // pred_fallthru
          _
        // Predicated region
        $region25: #{tpu_custom_call.1} parent=11 // pred_check
          %p359 = pneg %p267
        $region26: #{tpu_custom_call.1} parent=11 // pred_check_branch
          %361 = sbr.rel (%p359) target = $region28
        $region27: #{tpu_custom_call.1} parent=11 // pred_region
          _
        $region28: #{tpu_custom_call.1} parent=11 // pred_fallthru
          _
        // Predicated region
        $region29: #{tpu_custom_call.1} parent=11 // pred_check
          %p362 = pneg %p288
        $region30: #{tpu_custom_call.1} parent=11 // pred_check_branch
          %364 = sbr.rel (%p362) target = $region32
        $region31: #{tpu_custom_call.1} parent=11 // pred_region
          _
        $region32: #{tpu_custom_call.1} parent=11 // pred_fallthru
          _
        // Predicated region
        $region33: #{tpu_custom_call.1} parent=11 // pred_check
          %p365 = pneg %p309
        $region34: #{tpu_custom_call.1} parent=11 // pred_check_branch
          %367 = sbr.rel (%p365) target = $region36
        $region35: #{tpu_custom_call.1} parent=11 // pred_region
          _
        $region36: #{tpu_custom_call.1} parent=11 // pred_fallthru
          _
      $region12: #{tpu_custom_call.1} parent=5 // pred_fallthru
        _
      %p368 = scmp.lt.s32.totalorder %s27, 2
      // Predicated region
      $region37: #{tpu_custom_call.1} parent=5 // pred_check
        %p369 = pneg %p368
      $region38: #{tpu_custom_call.1} parent=5 // pred_check_branch
        %371 = sbr.rel (%p369) target = $region40
      $region39: #{tpu_custom_call.1} parent=5 // pred_region
        // Predicated region
        $region41: #{tpu_custom_call.1} parent=39 // pred_check
          %p372 = pneg %p47
        $region42: #{tpu_custom_call.1} parent=39 // pred_check_branch
          %374 = sbr.rel (%p372) target = $region44
        $region43: #{tpu_custom_call.1} parent=39 // pred_region
          %s375 = sand.u32 %s37, 1
          %s376 = scalar_lea.sflag [#allocation3], %s375
          %s377 = sand.u32 %s37, 1
          %s378 = smul.addr %s377, 128
          %s379 = scalar_lea.vmem [#allocation2], %s378
          %381 = vsyncadd %s376, 0
          %s382 = smul.addr %s27, 16
          %s383 = smul.addr %s382, 8
          %s384 = scalar_lea.hbm %s0, %s383
          %s385 = sshll.u32 %s384, 4
          %s386 = int_to_ptr.hbm [resolvable:$true] %s385
          %s387 = sshll.u32 %s379, 4
          %s388 = int_to_ptr.vmem [resolvable:$true] %s387
          %393 = dma.hbm_to_vmem [thread:$0]  %s386, 2048, %s388, %s376, 128, 128, 8
        $region44: #{tpu_custom_call.1} parent=39 // pred_fallthru
          _
        // Predicated region
        $region45: #{tpu_custom_call.1} parent=39 // pred_check
          %p394 = pneg %p73
        $region46: #{tpu_custom_call.1} parent=39 // pred_check_branch
          %396 = sbr.rel (%p394) target = $region48
        $region47: #{tpu_custom_call.1} parent=39 // pred_region
          %s397 = sand.u32 %s63, 1
          %s398 = scalar_lea.sflag [#allocation6], %s397
          %s399 = sand.u32 %s63, 1
          %s400 = smul.addr %s399, 256
          %s401 = scalar_lea.vmem [#allocation5], %s400
          %403 = vsyncadd %s398, 0
          %s404 = smul.addr %s27, 32
          %s405 = smul.addr %s404, 8
          %s406 = scalar_lea.hbm %s1, %s405
          %s407 = sshll.u32 %s406, 4
          %s408 = int_to_ptr.hbm [resolvable:$true] %s407
          %s409 = sshll.u32 %s401, 4
          %s410 = int_to_ptr.vmem [resolvable:$true] %s409
          %415 = dma.hbm_to_vmem [thread:$0]  %s408, 4096, %s410, %s398, 128, 128, 8
        $region48: #{tpu_custom_call.1} parent=39 // pred_fallthru
          _
        // Predicated region
        $region49: #{tpu_custom_call.1} parent=39 // pred_check
          %p416 = pneg %p99
        $region50: #{tpu_custom_call.1} parent=39 // pred_check_branch
          %418 = sbr.rel (%p416) target = $region52
        $region51: #{tpu_custom_call.1} parent=39 // pred_region
          %p419 = scmp.lt.s32.totalorder %s27, 1
          %s420 = scalar_select %p419, %s27, 1
          %s421 = smul.addr %s420, 2
          %s422 = smul.addr %s421, 8
          %s423 = scalar_lea.vmem %s2, %s422
        $region52: #{tpu_custom_call.1} parent=39 // pred_fallthru
          _
        // Predicated region
        $region53: #{tpu_custom_call.1} parent=39 // pred_check
          %p424 = pneg %p125
        $region54: #{tpu_custom_call.1} parent=39 // pred_check_branch
          %426 = sbr.rel (%p424) target = $region56
        $region55: #{tpu_custom_call.1} parent=39 // pred_region
          %p427 = scmp.lt.s32.totalorder %s27, 1
          %s428 = scalar_select %p427, %s27, 1
          %s429 = smul.addr %s428, 2
          %s430 = smul.addr %s429, 8
          %s431 = scalar_lea.vmem %s3, %s430
        $region56: #{tpu_custom_call.1} parent=39 // pred_fallthru
          _
        // Predicated region
        $region57: #{tpu_custom_call.1} parent=39 // pred_check
          %p432 = pneg %p151
        $region58: #{tpu_custom_call.1} parent=39 // pred_check_branch
          %434 = sbr.rel (%p432) target = $region60
        $region59: #{tpu_custom_call.1} parent=39 // pred_region
          %p435 = scmp.lt.s32.totalorder %s27, 1
          %s436 = scalar_select %p435, %s27, 1
          %s437 = scalar_lea.vmem %s4, %s436
        $region60: #{tpu_custom_call.1} parent=39 // pred_fallthru
          _
        // Predicated region
        $region61: #{tpu_custom_call.1} parent=39 // pred_check
          %p438 = pneg %p177
        $region62: #{tpu_custom_call.1} parent=39 // pred_check_branch
          %440 = sbr.rel (%p438) target = $region64
        $region63: #{tpu_custom_call.1} parent=39 // pred_region
          %p441 = scmp.lt.s32.totalorder %s27, 1
          %s442 = scalar_select %p441, %s27, 1
          %s443 = scalar_lea.vmem %s5, %s442
        $region64: #{tpu_custom_call.1} parent=39 // pred_fallthru
          _
      $region40: #{tpu_custom_call.1} parent=5 // pred_fallthru
        _
      %p444 = scmp.le.s32.totalorder 1, %s27
      %p445 = scmp.lt.s32.totalorder %s27, 3
      %p446 = pnand %p444, %p445
      %p447 = pneg %p446
      // Predicated region
      $region65: #{tpu_custom_call.1} parent=5 // pred_check
        _
      $region66: #{tpu_custom_call.1} parent=5 // pred_check_branch
        %449 = sbr.rel (%p446) target = $region68
      $region67: #{tpu_custom_call.1} parent=5 // pred_region
        %s450 = ssub.s32 %s27, 1
        %s451 = sand.u32 %s40, 1
        %s452 = scalar_lea.sflag [#allocation3], %s451
        %s453 = sand.u32 %s40, 1
        %s454 = smul.addr %s453, 128
        %s455 = scalar_lea.vmem [#allocation2], %s454
        // Predicated region
        $region69: #{tpu_custom_call.1} parent=67 // pred_check
          %p456 = pneg %p53
        $region70: #{tpu_custom_call.1} parent=67 // pred_check_branch
          %458 = sbr.rel (%p456) target = $region72
        $region71: #{tpu_custom_call.1} parent=67 // pred_region
          %460 = dma.done %s452, 2048
        $region72: #{tpu_custom_call.1} parent=67 // pred_fallthru
          _
        %s461 = sand.u32 %s66, 1
        %s462 = scalar_lea.sflag [#allocation6], %s461
        %s463 = sand.u32 %s66, 1
        %s464 = smul.addr %s463, 256
        %s465 = scalar_lea.vmem [#allocation5], %s464
        // Predicated region
        $region73: #{tpu_custom_call.1} parent=67 // pred_check
          %p466 = pneg %p79
        $region74: #{tpu_custom_call.1} parent=67 // pred_check_branch
          %468 = sbr.rel (%p466) target = $region76
        $region75: #{tpu_custom_call.1} parent=67 // pred_region
          %470 = dma.done %s462, 4096
        $region76: #{tpu_custom_call.1} parent=67 // pred_fallthru
          _
        %s471 = sand.u32 %s40, 1
        %s472 = scalar_lea.sflag [#allocation3], %s471
        %s473 = sand.u32 %s40, 1
        %s474 = smul.addr %s473, 128
        %s475 = scalar_lea.vmem [#allocation2], %s474
        %p476 = pneg %p53
        %p477 = pneg %p50
        %s478 = sand.u32 %s66, 1
        %s479 = scalar_lea.sflag [#allocation6], %s478
        %s480 = sand.u32 %s66, 1
        %s481 = smul.addr %s480, 256
        %s482 = scalar_lea.vmem [#allocation5], %s481
        %p483 = pneg %p79
        %p484 = pneg %p76
        %p485 = scmp.lt.s32.totalorder %s32, 1
        %s486 = scalar_select %p485, %s32, 1
        %s487 = smul.addr %s486, 2
        %s488 = smul.addr %s487, 8
        %s489 = scalar_lea.vmem %s2, %s488
        %p490 = pneg %p105
        %p491 = pneg %p102
        %p492 = scmp.lt.s32.totalorder %s32, 1
        %s493 = scalar_select %p492, %s32, 1
        %s494 = smul.addr %s493, 2
        %s495 = smul.addr %s494, 8
        %s496 = scalar_lea.vmem %s3, %s495
        %p497 = pneg %p131
        %p498 = pneg %p128
        %p499 = scmp.lt.s32.totalorder %s32, 1
        %s500 = scalar_select %p499, %s32, 1
        %s501 = scalar_lea.vmem %s4, %s500
        %p502 = pneg %p157
        %p503 = pneg %p154
        %p504 = scmp.lt.s32.totalorder %s32, 1
        %s505 = scalar_select %p504, %s32, 1
        %s506 = scalar_lea.vmem %s5, %s505
        %p507 = pneg %p183
        %p508 = pneg %p180
        %p509 = pneg %p204
        %p510 = pneg %p201
        %p511 = pneg %p225
        %p512 = pneg %p222
        %p513 = pneg %p246
        %p514 = pneg %p243
        %p515 = pneg %p267
        %p516 = pneg %p264
        %p517 = pneg %p288
        %p518 = pneg %p285
        %p519 = pneg %p309
        %p520 = pneg %p306
        %p521 = pneg %p335
        %p522 = pneg %p332
        %s523 = sand.u32 %s322, 1
        %s524 = scalar_lea.sflag [#allocation4], %s523
        %s525 = sand.u32 %s322, 1
        %s526 = smul.addr %s525, 16
        %s527 = scalar_lea.vmem [#allocation7], %s526
        %p528 = scmp.lt.s32.totalorder %s32, 1
        %s529 = scalar_select %p528, %s32, 1
        %s530 = smul.addr %s529, 2
        %s531 = smul.addr %s530, 8
        %s532 = scalar_lea.vmem %s2, %s531
        %p533 = scmp.lt.s32.totalorder %s32, 1
        %s534 = scalar_select %p533, %s32, 1
        %s535 = smul.addr %s534, 2
        %s536 = smul.addr %s535, 8
        %s537 = scalar_lea.vmem %s3, %s536
        %p538 = scmp.lt.s32.totalorder %s32, 1
        %s539 = scalar_select %p538, %s32, 1
        %s540 = scalar_lea.vmem %s4, %s539
        %p541 = scmp.lt.s32.totalorder %s32, 1
        %s542 = scalar_select %p541, %s32, 1
        %s543 = scalar_lea.vmem %s5, %s542
        %v544 = vld [vmem:[%s455] sm:$0xff]
        %v545 = vld [vmem:[%s455 + $0x8] sm:$0xff]
        %v546 = vld [vmem:[%s455 + $0x10] sm:$0xff]
        %v547 = vld [vmem:[%s455 + $0x18] sm:$0xff]
        %v548 = vld [vmem:[%s455 + $0x20] sm:$0xff]
        %v549 = vld [vmem:[%s455 + $0x28] sm:$0xff]
        %v550 = vld [vmem:[%s455 + $0x30] sm:$0xff]
        %v551 = vld [vmem:[%s455 + $0x38] sm:$0xff]
        %v552 = vld [vmem:[%s455 + $0x40] sm:$0xff]
        %v553 = vld [vmem:[%s455 + $0x48] sm:$0xff]
        %v554 = vld [vmem:[%s455 + $0x50] sm:$0xff]
        %v555 = vld [vmem:[%s455 + $0x58] sm:$0xff]
        %v556 = vld [vmem:[%s455 + $0x60] sm:$0xff]
        %v557 = vld [vmem:[%s455 + $0x68] sm:$0xff]
        %v558 = vld [vmem:[%s455 + $0x70] sm:$0xff]
        %v559 = vld [vmem:[%s455 + $0x78] sm:$0xff]
        %v560 = vld [vmem:[%s6] sm:$0xff]
        %v561 = vld [vmem:[%s6 + $0x8] sm:$0xff]
        %v562 = vld [vmem:[%s6 + $0x10] sm:$0xff]
        %v563 = vld [vmem:[%s6 + $0x18] sm:$0xff]
        %v564 = vld [vmem:[%s7] sm:$0x1]
        %v566 = vperm.slane %v564, 0
        %vm568 = vcmask 261120
        %v570 = vsel %vm568, %v544, 0
        %v573 = vsel %vm568, %v545, 0
        %v576 = vsel %vm568, %v546, 0
        %v579 = vsel %vm568, %v547, 0
        %v582 = vsel %vm568, %v548, 0
        %v585 = vsel %vm568, %v549, 0
        %v588 = vsel %vm568, %v550, 0
        %v591 = vsel %vm568, %v551, 0
        %v594 = vsel %vm568, %v552, 0
        %v597 = vsel %vm568, %v553, 0
        %v600 = vsel %vm568, %v554, 0
        %v603 = vsel %vm568, %v555, 0
        %v606 = vsel %vm568, %v556, 0
        %v609 = vsel %vm568, %v557, 0
        %v612 = vsel %vm568, %v558, 0
        %v615 = vsel %vm568, %v559, 0
        %617 = vmatpush.msra.mxu0 0.0
        %618 = vmatpush.msra.mxu0 0.0
        %619 = vmatpush.msra.mxu0 0.0
        %620 = vmatpush.msra.mxu0 0.0
        %621 = vmatpush.msra.mxu0 0.0
        %622 = vmatpush.msra.mxu0 0.0
        %623 = vmatpush.msra.mxu0 0.0
        %624 = vmatpush.msra.mxu0 0.0
        %625 = vmatpush.msra.mxu0 0.0
        %626 = vmatpush.msra.mxu0 0.0
        %627 = vmatpush.msra.mxu0 0.0
        %628 = vmatpush.msra.mxu0 0.0
        %629 = vmatpush.msra.mxu0 %v563
        %630 = vmatpush.msra.mxu0 %v562
        %631 = vmatpush.msra.mxu0 %v561
        %632 = vmatpush.msra.mxu0 %v560
        %633 = vmatmul.f32.gmra.mxu0 %v570
        %v634 = vpop.f32.mrf.mxu0
        %v635 = vadd.f32 %v566, %v634
        %636 = vmatmul.f32.gmra.mxu0 %v573
        %v637 = vpop.f32.mrf.mxu0
        %v638 = vadd.f32 %v566, %v637
        %639 = vmatmul.f32.gmra.mxu0 %v576
        %v640 = vpop.f32.mrf.mxu0
        %v641 = vadd.f32 %v566, %v640
        %642 = vmatmul.f32.gmra.mxu0 %v579
        %v643 = vpop.f32.mrf.mxu0
        %v644 = vadd.f32 %v566, %v643
        %645 = vmatmul.f32.gmra.mxu0 %v582
        %v646 = vpop.f32.mrf.mxu0
        %v647 = vadd.f32 %v566, %v646
        %648 = vmatmul.f32.gmra.mxu0 %v585
        %v649 = vpop.f32.mrf.mxu0
        %v650 = vadd.f32 %v566, %v649
        %651 = vmatmul.f32.gmra.mxu0 %v588
        %v652 = vpop.f32.mrf.mxu0
        %v653 = vadd.f32 %v566, %v652
        %654 = vmatmul.f32.gmra.mxu0 %v591
        %v655 = vpop.f32.mrf.mxu0
        %v656 = vadd.f32 %v566, %v655
        %657 = vmatmul.f32.gmra.mxu0 %v594
        %v658 = vpop.f32.mrf.mxu0
        %v659 = vadd.f32 %v566, %v658
        %660 = vmatmul.f32.gmra.mxu0 %v597
        %v661 = vpop.f32.mrf.mxu0
        %v662 = vadd.f32 %v566, %v661
        %663 = vmatmul.f32.gmra.mxu0 %v600
        %v664 = vpop.f32.mrf.mxu0
        %v665 = vadd.f32 %v566, %v664
        %666 = vmatmul.f32.gmra.mxu0 %v603
        %v667 = vpop.f32.mrf.mxu0
        %v668 = vadd.f32 %v566, %v667
        %669 = vmatmul.f32.gmra.mxu0 %v606
        %v670 = vpop.f32.mrf.mxu0
        %v671 = vadd.f32 %v566, %v670
        %672 = vmatmul.f32.gmra.mxu0 %v609
        %v673 = vpop.f32.mrf.mxu0
        %v674 = vadd.f32 %v566, %v673
        %675 = vmatmul.f32.gmra.mxu0 %v612
        %v676 = vpop.f32.mrf.mxu0
        %v677 = vadd.f32 %v566, %v676
        %678 = vmatmul.f32.gmra.mxu0 %v615
        %v679 = vpop.f32.mrf.mxu0
        %v680 = vadd.f32 %v566, %v679
        %681 = vdwg.mxu0
        %v682 = vmax.f32 %v635, 0.0
        %v683 = vmax.f32 %v638, 0.0
        %v684 = vmax.f32 %v641, 0.0
        %v685 = vmax.f32 %v644, 0.0
        %v686 = vmax.f32 %v647, 0.0
        %v687 = vmax.f32 %v650, 0.0
        %v688 = vmax.f32 %v653, 0.0
        %v689 = vmax.f32 %v656, 0.0
        %v690 = vmax.f32 %v659, 0.0
        %v691 = vmax.f32 %v662, 0.0
        %v692 = vmax.f32 %v665, 0.0
        %v693 = vmax.f32 %v668, 0.0
        %v694 = vmax.f32 %v671, 0.0
        %v695 = vmax.f32 %v674, 0.0
        %v696 = vmax.f32 %v677, 0.0
        %v697 = vmax.f32 %v680, 0.0
        %v698 = vld [vmem:[%s540] sm:$0x1]
        %v699 = vperm.slane %v698, 0
        %v700 = vlaneseq
        %v701 = vshrl.u32 %v700, 7
        %703 = vset.pattern.permute.xlu0 %v701
        %704 = vperm.xlu0 %703, %v699
        %v705 = vpop.permute.xlu0 %704
        %v706 = vmul.f32 %v682, %v705
        %v707 = vmul.f32 %v683, %v705
        %v708 = vmul.f32 %v684, %v705
        %v709 = vmul.f32 %v685, %v705
        %v710 = vmul.f32 %v686, %v705
        %v711 = vmul.f32 %v687, %v705
        %v712 = vmul.f32 %v688, %v705
        %v713 = vmul.f32 %v689, %v705
        %v714 = vmul.f32 %v690, %v705
        %v715 = vmul.f32 %v691, %v705
        %v716 = vmul.f32 %v692, %v705
        %v717 = vmul.f32 %v693, %v705
        %v718 = vmul.f32 %v694, %v705
        %v719 = vmul.f32 %v695, %v705
        %v720 = vmul.f32 %v696, %v705
        %v721 = vmul.f32 %v697, %v705
        %v722 = vsel %vm568, %v706, -inf
        %v723 = vrot.slane %v722, 4
        %v724 = vmax.f32 %v722, %v723
        %v725 = vrot.slane %v724, 2
        %v726 = vmax.f32 %v724, %v725
        %v727 = vrot.slane %v726, 1
        %v728 = vmax.f32 %v726, %v727
        %v729 = vsel %vm568, %v707, -inf
        %v730 = vrot.slane %v729, 4
        %v731 = vmax.f32 %v729, %v730
        %v732 = vrot.slane %v731, 2
        %v733 = vmax.f32 %v731, %v732
        %v734 = vrot.slane %v733, 1
        %v735 = vmax.f32 %v733, %v734
        %v736 = vsel %vm568, %v708, -inf
        %v737 = vrot.slane %v736, 4
        %v738 = vmax.f32 %v736, %v737
        %v739 = vrot.slane %v738, 2
        %v740 = vmax.f32 %v738, %v739
        %v741 = vrot.slane %v740, 1
        %v742 = vmax.f32 %v740, %v741
        %v743 = vsel %vm568, %v709, -inf
        %v744 = vrot.slane %v743, 4
        %v745 = vmax.f32 %v743, %v744
        %v746 = vrot.slane %v745, 2
        %v747 = vmax.f32 %v745, %v746
        %v748 = vrot.slane %v747, 1
        %v749 = vmax.f32 %v747, %v748
        %v750 = vsel %vm568, %v710, -inf
        %v751 = vrot.slane %v750, 4
        %v752 = vmax.f32 %v750, %v751
        %v753 = vrot.slane %v752, 2
        %v754 = vmax.f32 %v752, %v753
        %v755 = vrot.slane %v754, 1
        %v756 = vmax.f32 %v754, %v755
        %v757 = vsel %vm568, %v711, -inf
        %v758 = vrot.slane %v757, 4
        %v759 = vmax.f32 %v757, %v758
        %v760 = vrot.slane %v759, 2
        %v761 = vmax.f32 %v759, %v760
        %v762 = vrot.slane %v761, 1
        %v763 = vmax.f32 %v761, %v762
        %v764 = vsel %vm568, %v712, -inf
        %v765 = vrot.slane %v764, 4
        %v766 = vmax.f32 %v764, %v765
        %v767 = vrot.slane %v766, 2
        %v768 = vmax.f32 %v766, %v767
        %v769 = vrot.slane %v768, 1
        %v770 = vmax.f32 %v768, %v769
        %v771 = vsel %vm568, %v713, -inf
        %v772 = vrot.slane %v771, 4
        %v773 = vmax.f32 %v771, %v772
        %v774 = vrot.slane %v773, 2
        %v775 = vmax.f32 %v773, %v774
        %v776 = vrot.slane %v775, 1
        %v777 = vmax.f32 %v775, %v776
        %v778 = vsel %vm568, %v714, -inf
        %v779 = vrot.slane %v778, 4
        %v780 = vmax.f32 %v778, %v779
        %v781 = vrot.slane %v780, 2
        %v782 = vmax.f32 %v780, %v781
        %v783 = vrot.slane %v782, 1
        %v784 = vmax.f32 %v782, %v783
        %v785 = vsel %vm568, %v715, -inf
        %v786 = vrot.slane %v785, 4
        %v787 = vmax.f32 %v785, %v786
        %v788 = vrot.slane %v787, 2
        %v789 = vmax.f32 %v787, %v788
        %v790 = vrot.slane %v789, 1
        %v791 = vmax.f32 %v789, %v790
        %v792 = vsel %vm568, %v716, -inf
        %v793 = vrot.slane %v792, 4
        %v794 = vmax.f32 %v792, %v793
        %v795 = vrot.slane %v794, 2
        %v796 = vmax.f32 %v794, %v795
        %v797 = vrot.slane %v796, 1
        %v798 = vmax.f32 %v796, %v797
        %v799 = vsel %vm568, %v717, -inf
        %v800 = vrot.slane %v799, 4
        %v801 = vmax.f32 %v799, %v800
        %v802 = vrot.slane %v801, 2
        %v803 = vmax.f32 %v801, %v802
        %v804 = vrot.slane %v803, 1
        %v805 = vmax.f32 %v803, %v804
        %v806 = vsel %vm568, %v718, -inf
        %v807 = vrot.slane %v806, 4
        %v808 = vmax.f32 %v806, %v807
        %v809 = vrot.slane %v808, 2
        %v810 = vmax.f32 %v808, %v809
        %v811 = vrot.slane %v810, 1
        %v812 = vmax.f32 %v810, %v811
        %v813 = vsel %vm568, %v719, -inf
        %v814 = vrot.slane %v813, 4
        %v815 = vmax.f32 %v813, %v814
        %v816 = vrot.slane %v815, 2
        %v817 = vmax.f32 %v815, %v816
        %v818 = vrot.slane %v817, 1
        %v819 = vmax.f32 %v817, %v818
        %v820 = vsel %vm568, %v720, -inf
        %v821 = vrot.slane %v820, 4
        %v822 = vmax.f32 %v820, %v821
        %v823 = vrot.slane %v822, 2
        %v824 = vmax.f32 %v822, %v823
        %v825 = vrot.slane %v824, 1
        %v826 = vmax.f32 %v824, %v825
        %v827 = vsel %vm568, %v721, -inf
        %v828 = vrot.slane %v827, 4
        %v829 = vmax.f32 %v827, %v828
        %v830 = vrot.slane %v829, 2
        %v831 = vmax.f32 %v829, %v830
        %v832 = vrot.slane %v831, 1
        %v833 = vmax.f32 %v831, %v832
        %v834 = vld [vmem:[%s465] sm:$0xff]
        %v835 = vld [vmem:[%s465 + $0x8] sm:$0xff]
        %v836 = vld [vmem:[%s465 + $0x10] sm:$0xff]
        %v837 = vld [vmem:[%s465 + $0x18] sm:$0xff]
        %v838 = vld [vmem:[%s465 + $0x20] sm:$0xff]
        %v839 = vld [vmem:[%s465 + $0x28] sm:$0xff]
        %v840 = vld [vmem:[%s465 + $0x30] sm:$0xff]
        %v841 = vld [vmem:[%s465 + $0x38] sm:$0xff]
        %v842 = vld [vmem:[%s465 + $0x40] sm:$0xff]
        %v843 = vld [vmem:[%s465 + $0x48] sm:$0xff]
        %v844 = vld [vmem:[%s465 + $0x50] sm:$0xff]
        %v845 = vld [vmem:[%s465 + $0x58] sm:$0xff]
        %v846 = vld [vmem:[%s465 + $0x60] sm:$0xff]
        %v847 = vld [vmem:[%s465 + $0x68] sm:$0xff]
        %v848 = vld [vmem:[%s465 + $0x70] sm:$0xff]
        %v849 = vld [vmem:[%s465 + $0x78] sm:$0xff]
        %v850 = vld [vmem:[%s465 + $0x80] sm:$0xff]
        %v851 = vld [vmem:[%s465 + $0x88] sm:$0xff]
        %v852 = vld [vmem:[%s465 + $0x90] sm:$0xff]
        %v853 = vld [vmem:[%s465 + $0x98] sm:$0xff]
        %v854 = vld [vmem:[%s465 + $0xa0] sm:$0xff]
        %v855 = vld [vmem:[%s465 + $0xa8] sm:$0xff]
        %v856 = vld [vmem:[%s465 + $0xb0] sm:$0xff]
        %v857 = vld [vmem:[%s465 + $0xb8] sm:$0xff]
        %v858 = vld [vmem:[%s465 + $0xc0] sm:$0xff]
        %v859 = vld [vmem:[%s465 + $0xc8] sm:$0xff]
        %v860 = vld [vmem:[%s465 + $0xd0] sm:$0xff]
        %v861 = vld [vmem:[%s465 + $0xd8] sm:$0xff]
        %v862 = vld [vmem:[%s465 + $0xe0] sm:$0xff]
        %v863 = vld [vmem:[%s465 + $0xe8] sm:$0xff]
        %v864 = vld [vmem:[%s465 + $0xf0] sm:$0xff]
        %v865 = vld [vmem:[%s465 + $0xf8] sm:$0xff]
        %v866 = vld [vmem:[%s8] sm:$0xff]
        %v867 = vld [vmem:[%s8 + $0x8] sm:$0xff]
        %v868 = vld [vmem:[%s8 + $0x10] sm:$0xff]
        %v869 = vld [vmem:[%s8 + $0x18] sm:$0xff]
        %v870 = vld [vmem:[%s9] sm:$0x1]
        %v872 = vperm.slane %v870, 0
        %v875 = vsel %vm568, %v834, 0
        %v878 = vsel %vm568, %v835, 0
        %v881 = vsel %vm568, %v836, 0
        %v884 = vsel %vm568, %v837, 0
        %v887 = vsel %vm568, %v838, 0
        %v890 = vsel %vm568, %v839, 0
        %v893 = vsel %vm568, %v840, 0
        %v896 = vsel %vm568, %v841, 0
        %v899 = vsel %vm568, %v842, 0
        %v902 = vsel %vm568, %v843, 0
        %v905 = vsel %vm568, %v844, 0
        %v908 = vsel %vm568, %v845, 0
        %v911 = vsel %vm568, %v846, 0
        %v914 = vsel %vm568, %v847, 0
        %v917 = vsel %vm568, %v848, 0
        %v920 = vsel %vm568, %v849, 0
        %v923 = vsel %vm568, %v850, 0
        %v926 = vsel %vm568, %v851, 0
        %v929 = vsel %vm568, %v852, 0
        %v932 = vsel %vm568, %v853, 0
        %v935 = vsel %vm568, %v854, 0
        %v938 = vsel %vm568, %v855, 0
        %v941 = vsel %vm568, %v856, 0
        %v944 = vsel %vm568, %v857, 0
        %v947 = vsel %vm568, %v858, 0
        %v950 = vsel %vm568, %v859, 0
        %v953 = vsel %vm568, %v860, 0
        %v956 = vsel %vm568, %v861, 0
        %v959 = vsel %vm568, %v862, 0
        %v962 = vsel %vm568, %v863, 0
        %v965 = vsel %vm568, %v864, 0
        %v968 = vsel %vm568, %v865, 0
        %970 = vmatpush.msra.mxu0 0.0
        %971 = vmatpush.msra.mxu0 0.0
        %972 = vmatpush.msra.mxu0 0.0
        %973 = vmatpush.msra.mxu0 0.0
        %974 = vmatpush.msra.mxu0 0.0
        %975 = vmatpush.msra.mxu0 0.0
        %976 = vmatpush.msra.mxu0 0.0
        %977 = vmatpush.msra.mxu0 0.0
        %978 = vmatpush.msra.mxu0 0.0
        %979 = vmatpush.msra.mxu0 0.0
        %980 = vmatpush.msra.mxu0 0.0
        %981 = vmatpush.msra.mxu0 0.0
        %982 = vmatpush.msra.mxu0 %v869
        %983 = vmatpush.msra.mxu0 %v868
        %984 = vmatpush.msra.mxu0 %v867
        %985 = vmatpush.msra.mxu0 %v866
        %986 = vmatmul.f32.gmra.mxu0 %v875
        %v987 = vpop.f32.mrf.mxu0
        %v988 = vadd.f32 %v872, %v987
        %989 = vmatmul.f32.gmra.mxu0 %v878
        %v990 = vpop.f32.mrf.mxu0
        %v991 = vadd.f32 %v872, %v990
        %992 = vmatmul.f32.gmra.mxu0 %v881
        %v993 = vpop.f32.mrf.mxu0
        %v994 = vadd.f32 %v872, %v993
        %995 = vmatmul.f32.gmra.mxu0 %v884
        %v996 = vpop.f32.mrf.mxu0
        %v997 = vadd.f32 %v872, %v996
        %998 = vmatmul.f32.gmra.mxu0 %v887
        %v999 = vpop.f32.mrf.mxu0
        %v1000 = vadd.f32 %v872, %v999
        %1001 = vmatmul.f32.gmra.mxu0 %v890
        %v1002 = vpop.f32.mrf.mxu0
        %v1003 = vadd.f32 %v872, %v1002
        %1004 = vmatmul.f32.gmra.mxu0 %v893
        %v1005 = vpop.f32.mrf.mxu0
        %v1006 = vadd.f32 %v872, %v1005
        %1007 = vmatmul.f32.gmra.mxu0 %v896
        %v1008 = vpop.f32.mrf.mxu0
        %v1009 = vadd.f32 %v872, %v1008
        %1010 = vmatmul.f32.gmra.mxu0 %v899
        %v1011 = vpop.f32.mrf.mxu0
        %v1012 = vadd.f32 %v872, %v1011
        %1013 = vmatmul.f32.gmra.mxu0 %v902
        %v1014 = vpop.f32.mrf.mxu0
        %v1015 = vadd.f32 %v872, %v1014
        %1016 = vmatmul.f32.gmra.mxu0 %v905
        %v1017 = vpop.f32.mrf.mxu0
        %v1018 = vadd.f32 %v872, %v1017
        %1019 = vmatmul.f32.gmra.mxu0 %v908
        %v1020 = vpop.f32.mrf.mxu0
        %v1021 = vadd.f32 %v872, %v1020
        %1022 = vmatmul.f32.gmra.mxu0 %v911
        %v1023 = vpop.f32.mrf.mxu0
        %v1024 = vadd.f32 %v872, %v1023
        %1025 = vmatmul.f32.gmra.mxu0 %v914
        %v1026 = vpop.f32.mrf.mxu0
        %v1027 = vadd.f32 %v872, %v1026
        %1028 = vmatmul.f32.gmra.mxu0 %v917
        %v1029 = vpop.f32.mrf.mxu0
        %v1030 = vadd.f32 %v872, %v1029
        %1031 = vmatmul.f32.gmra.mxu0 %v920
        %v1032 = vpop.f32.mrf.mxu0
        %v1033 = vadd.f32 %v872, %v1032
        %1034 = vmatmul.f32.gmra.mxu0 %v923
        %v1035 = vpop.f32.mrf.mxu0
        %v1036 = vadd.f32 %v872, %v1035
        %1037 = vmatmul.f32.gmra.mxu0 %v926
        %v1038 = vpop.f32.mrf.mxu0
        %v1039 = vadd.f32 %v872, %v1038
        %1040 = vmatmul.f32.gmra.mxu0 %v929
        %v1041 = vpop.f32.mrf.mxu0
        %v1042 = vadd.f32 %v872, %v1041
        %1043 = vmatmul.f32.gmra.mxu0 %v932
        %v1044 = vpop.f32.mrf.mxu0
        %v1045 = vadd.f32 %v872, %v1044
        %1046 = vmatmul.f32.gmra.mxu0 %v935
        %v1047 = vpop.f32.mrf.mxu0
        %v1048 = vadd.f32 %v872, %v1047
        %1049 = vmatmul.f32.gmra.mxu0 %v938
        %v1050 = vpop.f32.mrf.mxu0
        %v1051 = vadd.f32 %v872, %v1050
        %1052 = vmatmul.f32.gmra.mxu0 %v941
        %v1053 = vpop.f32.mrf.mxu0
        %v1054 = vadd.f32 %v872, %v1053
        %1055 = vmatmul.f32.gmra.mxu0 %v944
        %v1056 = vpop.f32.mrf.mxu0
        %v1057 = vadd.f32 %v872, %v1056
        %1058 = vmatmul.f32.gmra.mxu0 %v947
        %v1059 = vpop.f32.mrf.mxu0
        %v1060 = vadd.f32 %v872, %v1059
        %1061 = vmatmul.f32.gmra.mxu0 %v950
        %v1062 = vpop.f32.mrf.mxu0
        %v1063 = vadd.f32 %v872, %v1062
        %1064 = vmatmul.f32.gmra.mxu0 %v953
        %v1065 = vpop.f32.mrf.mxu0
        %v1066 = vadd.f32 %v872, %v1065
        %1067 = vmatmul.f32.gmra.mxu0 %v956
        %v1068 = vpop.f32.mrf.mxu0
        %v1069 = vadd.f32 %v872, %v1068
        %1070 = vmatmul.f32.gmra.mxu0 %v959
        %v1071 = vpop.f32.mrf.mxu0
        %v1072 = vadd.f32 %v872, %v1071
        %1073 = vmatmul.f32.gmra.mxu0 %v962
        %v1074 = vpop.f32.mrf.mxu0
        %v1075 = vadd.f32 %v872, %v1074
        %1076 = vmatmul.f32.gmra.mxu0 %v965
        %v1077 = vpop.f32.mrf.mxu0
        %v1078 = vadd.f32 %v872, %v1077
        %1079 = vmatmul.f32.gmra.mxu0 %v968
        %v1080 = vpop.f32.mrf.mxu0
        %v1081 = vadd.f32 %v872, %v1080
        %1082 = vdwg.mxu0
        %v1083 = vmax.f32 %v988, 0.0
        %v1084 = vmax.f32 %v991, 0.0
        %v1085 = vmax.f32 %v994, 0.0
        %v1086 = vmax.f32 %v997, 0.0
        %v1087 = vmax.f32 %v1000, 0.0
        %v1088 = vmax.f32 %v1003, 0.0
        %v1089 = vmax.f32 %v1006, 0.0
        %v1090 = vmax.f32 %v1009, 0.0
        %v1091 = vmax.f32 %v1012, 0.0
        %v1092 = vmax.f32 %v1015, 0.0
        %v1093 = vmax.f32 %v1018, 0.0
        %v1094 = vmax.f32 %v1021, 0.0
        %v1095 = vmax.f32 %v1024, 0.0
        %v1096 = vmax.f32 %v1027, 0.0
        %v1097 = vmax.f32 %v1030, 0.0
        %v1098 = vmax.f32 %v1033, 0.0
        %v1099 = vmax.f32 %v1036, 0.0
        %v1100 = vmax.f32 %v1039, 0.0
        %v1101 = vmax.f32 %v1042, 0.0
        %v1102 = vmax.f32 %v1045, 0.0
        %v1103 = vmax.f32 %v1048, 0.0
        %v1104 = vmax.f32 %v1051, 0.0
        %v1105 = vmax.f32 %v1054, 0.0
        %v1106 = vmax.f32 %v1057, 0.0
        %v1107 = vmax.f32 %v1060, 0.0
        %v1108 = vmax.f32 %v1063, 0.0
        %v1109 = vmax.f32 %v1066, 0.0
        %v1110 = vmax.f32 %v1069, 0.0
        %v1111 = vmax.f32 %v1072, 0.0
        %v1112 = vmax.f32 %v1075, 0.0
        %v1113 = vmax.f32 %v1078, 0.0
        %v1114 = vmax.f32 %v1081, 0.0
        %v1115 = vld [vmem:[%s543] sm:$0x1]
        %v1116 = vperm.slane %v1115, 0
        %v1117 = vlaneseq
        %v1118 = vshrl.u32 %v1117, 7
        %1120 = vset.pattern.permute.xlu0 %v1118
        %1121 = vperm.xlu0 %1120, %v1116
        %v1122 = vpop.permute.xlu0 %1121
        %v1123 = vlaneseq
        %v1124 = vshrl.u32 %v1123, 7
        %v1125 = vadd.s32 %v1124, 8
        %1126 = vset.pattern.permute.xlu0 %v1125
        %1127 = vperm.xlu0 %1126, %v1116
        %v1128 = vpop.permute.xlu0 %1127
        %v1129 = vmul.f32 %v1083, %v1122
        %v1130 = vmul.f32 %v1084, %v1128
        %v1131 = vmul.f32 %v1085, %v1122
        %v1132 = vmul.f32 %v1086, %v1128
        %v1133 = vmul.f32 %v1087, %v1122
        %v1134 = vmul.f32 %v1088, %v1128
        %v1135 = vmul.f32 %v1089, %v1122
        %v1136 = vmul.f32 %v1090, %v1128
        %v1137 = vmul.f32 %v1091, %v1122
        %v1138 = vmul.f32 %v1092, %v1128
        %v1139 = vmul.f32 %v1093, %v1122
        %v1140 = vmul.f32 %v1094, %v1128
        %v1141 = vmul.f32 %v1095, %v1122
        %v1142 = vmul.f32 %v1096, %v1128
        %v1143 = vmul.f32 %v1097, %v1122
        %v1144 = vmul.f32 %v1098, %v1128
        %v1145 = vmul.f32 %v1099, %v1122
        %v1146 = vmul.f32 %v1100, %v1128
        %v1147 = vmul.f32 %v1101, %v1122
        %v1148 = vmul.f32 %v1102, %v1128
        %v1149 = vmul.f32 %v1103, %v1122
        %v1150 = vmul.f32 %v1104, %v1128
        %v1151 = vmul.f32 %v1105, %v1122
        %v1152 = vmul.f32 %v1106, %v1128
        %v1153 = vmul.f32 %v1107, %v1122
        %v1154 = vmul.f32 %v1108, %v1128
        %v1155 = vmul.f32 %v1109, %v1122
        %v1156 = vmul.f32 %v1110, %v1128
        %v1157 = vmul.f32 %v1111, %v1122
        %v1158 = vmul.f32 %v1112, %v1128
        %v1159 = vmul.f32 %v1113, %v1122
        %v1160 = vmul.f32 %v1114, %v1128
        %v1161 = vsel %vm568, %v1129, -inf
        %v1162 = vsel %vm568, %v1130, -inf
        %v1163 = vmax.f32 %v1161, %v1162
        %v1164 = vrot.slane %v1163, 4
        %v1165 = vmax.f32 %v1163, %v1164
        %v1166 = vrot.slane %v1165, 2
        %v1167 = vmax.f32 %v1165, %v1166
        %v1168 = vrot.slane %v1167, 1
        %v1169 = vmax.f32 %v1167, %v1168
        %v1170 = vsel %vm568, %v1131, -inf
        %v1171 = vsel %vm568, %v1132, -inf
        %v1172 = vmax.f32 %v1170, %v1171
        %v1173 = vrot.slane %v1172, 4
        %v1174 = vmax.f32 %v1172, %v1173
        %v1175 = vrot.slane %v1174, 2
        %v1176 = vmax.f32 %v1174, %v1175
        %v1177 = vrot.slane %v1176, 1
        %v1178 = vmax.f32 %v1176, %v1177
        %v1179 = vsel %vm568, %v1133, -inf
        %v1180 = vsel %vm568, %v1134, -inf
        %v1181 = vmax.f32 %v1179, %v1180
        %v1182 = vrot.slane %v1181, 4
        %v1183 = vmax.f32 %v1181, %v1182
        %v1184 = vrot.slane %v1183, 2
        %v1185 = vmax.f32 %v1183, %v1184
        %v1186 = vrot.slane %v1185, 1
        %v1187 = vmax.f32 %v1185, %v1186
        %v1188 = vsel %vm568, %v1135, -inf
        %v1189 = vsel %vm568, %v1136, -inf
        %v1190 = vmax.f32 %v1188, %v1189
        %v1191 = vrot.slane %v1190, 4
        %v1192 = vmax.f32 %v1190, %v1191
        %v1193 = vrot.slane %v1192, 2
        %v1194 = vmax.f32 %v1192, %v1193
        %v1195 = vrot.slane %v1194, 1
        %v1196 = vmax.f32 %v1194, %v1195
        %v1197 = vsel %vm568, %v1137, -inf
        %v1198 = vsel %vm568, %v1138, -inf
        %v1199 = vmax.f32 %v1197, %v1198
        %v1200 = vrot.slane %v1199, 4
        %v1201 = vmax.f32 %v1199, %v1200
        %v1202 = vrot.slane %v1201, 2
        %v1203 = vmax.f32 %v1201, %v1202
        %v1204 = vrot.slane %v1203, 1
        %v1205 = vmax.f32 %v1203, %v1204
        %v1206 = vsel %vm568, %v1139, -inf
        %v1207 = vsel %vm568, %v1140, -inf
        %v1208 = vmax.f32 %v1206, %v1207
        %v1209 = vrot.slane %v1208, 4
        %v1210 = vmax.f32 %v1208, %v1209
        %v1211 = vrot.slane %v1210, 2
        %v1212 = vmax.f32 %v1210, %v1211
        %v1213 = vrot.slane %v1212, 1
        %v1214 = vmax.f32 %v1212, %v1213
        %v1215 = vsel %vm568, %v1141, -inf
        %v1216 = vsel %vm568, %v1142, -inf
        %v1217 = vmax.f32 %v1215, %v1216
        %v1218 = vrot.slane %v1217, 4
        %v1219 = vmax.f32 %v1217, %v1218
        %v1220 = vrot.slane %v1219, 2
        %v1221 = vmax.f32 %v1219, %v1220
        %v1222 = vrot.slane %v1221, 1
        %v1223 = vmax.f32 %v1221, %v1222
        %v1224 = vsel %vm568, %v1143, -inf
        %v1225 = vsel %vm568, %v1144, -inf
        %v1226 = vmax.f32 %v1224, %v1225
        %v1227 = vrot.slane %v1226, 4
        %v1228 = vmax.f32 %v1226, %v1227
        %v1229 = vrot.slane %v1228, 2
        %v1230 = vmax.f32 %v1228, %v1229
        %v1231 = vrot.slane %v1230, 1
        %v1232 = vmax.f32 %v1230, %v1231
        %v1233 = vsel %vm568, %v1145, -inf
        %v1234 = vsel %vm568, %v1146, -inf
        %v1235 = vmax.f32 %v1233, %v1234
        %v1236 = vrot.slane %v1235, 4
        %v1237 = vmax.f32 %v1235, %v1236
        %v1238 = vrot.slane %v1237, 2
        %v1239 = vmax.f32 %v1237, %v1238
        %v1240 = vrot.slane %v1239, 1
        %v1241 = vmax.f32 %v1239, %v1240
        %v1242 = vsel %vm568, %v1147, -inf
        %v1243 = vsel %vm568, %v1148, -inf
        %v1244 = vmax.f32 %v1242, %v1243
        %v1245 = vrot.slane %v1244, 4
        %v1246 = vmax.f32 %v1244, %v1245
        %v1247 = vrot.slane %v1246, 2
        %v1248 = vmax.f32 %v1246, %v1247
        %v1249 = vrot.slane %v1248, 1
        %v1250 = vmax.f32 %v1248, %v1249
        %v1251 = vsel %vm568, %v1149, -inf
        %v1252 = vsel %vm568, %v1150, -inf
        %v1253 = vmax.f32 %v1251, %v1252
        %v1254 = vrot.slane %v1253, 4
        %v1255 = vmax.f32 %v1253, %v1254
        %v1256 = vrot.slane %v1255, 2
        %v1257 = vmax.f32 %v1255, %v1256
        %v1258 = vrot.slane %v1257, 1
        %v1259 = vmax.f32 %v1257, %v1258
        %v1260 = vsel %vm568, %v1151, -inf
        %v1261 = vsel %vm568, %v1152, -inf
        %v1262 = vmax.f32 %v1260, %v1261
        %v1263 = vrot.slane %v1262, 4
        %v1264 = vmax.f32 %v1262, %v1263
        %v1265 = vrot.slane %v1264, 2
        %v1266 = vmax.f32 %v1264, %v1265
        %v1267 = vrot.slane %v1266, 1
        %v1268 = vmax.f32 %v1266, %v1267
        %v1269 = vsel %vm568, %v1153, -inf
        %v1270 = vsel %vm568, %v1154, -inf
        %v1271 = vmax.f32 %v1269, %v1270
        %v1272 = vrot.slane %v1271, 4
        %v1273 = vmax.f32 %v1271, %v1272
        %v1274 = vrot.slane %v1273, 2
        %v1275 = vmax.f32 %v1273, %v1274
        %v1276 = vrot.slane %v1275, 1
        %v1277 = vmax.f32 %v1275, %v1276
        %v1278 = vsel %vm568, %v1155, -inf
        %v1279 = vsel %vm568, %v1156, -inf
        %v1280 = vmax.f32 %v1278, %v1279
        %v1281 = vrot.slane %v1280, 4
        %v1282 = vmax.f32 %v1280, %v1281
        %v1283 = vrot.slane %v1282, 2
        %v1284 = vmax.f32 %v1282, %v1283
        %v1285 = vrot.slane %v1284, 1
        %v1286 = vmax.f32 %v1284, %v1285
        %v1287 = vsel %vm568, %v1157, -inf
        %v1288 = vsel %vm568, %v1158, -inf
        %v1289 = vmax.f32 %v1287, %v1288
        %v1290 = vrot.slane %v1289, 4
        %v1291 = vmax.f32 %v1289, %v1290
        %v1292 = vrot.slane %v1291, 2
        %v1293 = vmax.f32 %v1291, %v1292
        %v1294 = vrot.slane %v1293, 1
        %v1295 = vmax.f32 %v1293, %v1294
        %v1296 = vsel %vm568, %v1159, -inf
        %v1297 = vsel %vm568, %v1160, -inf
        %v1298 = vmax.f32 %v1296, %v1297
        %v1299 = vrot.slane %v1298, 4
        %v1300 = vmax.f32 %v1298, %v1299
        %v1301 = vrot.slane %v1300, 2
        %v1302 = vmax.f32 %v1300, %v1301
        %v1303 = vrot.slane %v1302, 1
        %v1304 = vmax.f32 %v1302, %v1303
        %v1305 = vld [vmem:[%s532] sm:$0xff]
        %v1306 = vld [vmem:[%s532 + $0x8] sm:$0xff]
        %v1307 = vld [vmem:[%s537] sm:$0xff]
        %v1308 = vld [vmem:[%s537 + $0x8] sm:$0xff]
        %v1309 = vld [vmem:[%s10] sm:$0xff]
        %v1310 = vld [vmem:[%s10 + $0x8] sm:$0xff]
        %v1311 = vld [vmem:[%s10 + $0x10] sm:$0xff]
        %v1312 = vld [vmem:[%s10 + $0x18] sm:$0xff]
        %v1313 = vld [vmem:[%s10 + $0x20] sm:$0xff]
        %v1314 = vld [vmem:[%s10 + $0x28] sm:$0xff]
        %v1315 = vld [vmem:[%s10 + $0x30] sm:$0xff]
        %v1316 = vld [vmem:[%s10 + $0x38] sm:$0xff]
        %v1318 = vsel %vm568, %v1307, 0
        %v1321 = vsel %vm568, %v1308, 0
        %1323 = vmatpush.msra.mxu0 0.0
        %1324 = vmatpush.msra.mxu0 0.0
        %1325 = vmatpush.msra.mxu0 0.0
        %1326 = vmatpush.msra.mxu0 0.0
        %1327 = vmatpush.msra.mxu0 0.0
        %1328 = vmatpush.msra.mxu0 0.0
        %1329 = vmatpush.msra.mxu0 0.0
        %1330 = vmatpush.msra.mxu0 0.0
        %1331 = vmatpush.msra.mxu0 0.0
        %1332 = vmatpush.msra.mxu0 0.0
        %1333 = vmatpush.msra.mxu0 0.0
        %1334 = vmatpush.msra.mxu0 0.0
        %1335 = vmatpush.msra.mxu0 %v1316
        %1336 = vmatpush.msra.mxu0 %v1315
        %1337 = vmatpush.msra.mxu0 %v1314
        %1338 = vmatpush.msra.mxu0 %v1313
        %1339 = vmatmul.f32.gmra.mxu0 %v1318
        %v1340 = vpop.f32.mrf.mxu0
        %v1341 = vadd.f32 0.0, %v1340
        %1342 = vmatmul.f32.gmra.mxu0 %v1321
        %v1343 = vpop.f32.mrf.mxu0
        %v1344 = vadd.f32 0.0, %v1343
        %1345 = vdwg.mxu0
        %v1347 = vsel %vm568, %v1305, 0
        %v1350 = vsel %vm568, %v1306, 0
        %1352 = vmatpush.msra.mxu0 0.0
        %1353 = vmatpush.msra.mxu0 0.0
        %1354 = vmatpush.msra.mxu0 0.0
        %1355 = vmatpush.msra.mxu0 0.0
        %1356 = vmatpush.msra.mxu0 0.0
        %1357 = vmatpush.msra.mxu0 0.0
        %1358 = vmatpush.msra.mxu0 0.0
        %1359 = vmatpush.msra.mxu0 0.0
        %1360 = vmatpush.msra.mxu0 0.0
        %1361 = vmatpush.msra.mxu0 0.0
        %1362 = vmatpush.msra.mxu0 0.0
        %1363 = vmatpush.msra.mxu0 0.0
        %1364 = vmatpush.msra.mxu0 %v1312
        %1365 = vmatpush.msra.mxu0 %v1311
        %1366 = vmatpush.msra.mxu0 %v1310
        %1367 = vmatpush.msra.mxu0 %v1309
        %1368 = vmatmul.f32.gmra.mxu0 %v1347
        %v1369 = vpop.f32.mrf.mxu0
        %v1370 = vadd.f32 %v1341, %v1369
        %1371 = vmatmul.f32.gmra.mxu0 %v1350
        %v1372 = vpop.f32.mrf.mxu0
        %v1373 = vadd.f32 %v1344, %v1372
        %1374 = vdwg.mxu0
        %v1375 = vld [vmem:[%s10 + $0x40] sm:$0xff]
        %v1376 = vld [vmem:[%s10 + $0x48] sm:$0xff]
        %v1377 = vld [vmem:[%s10 + $0x50] sm:$0xff]
        %v1378 = vld [vmem:[%s10 + $0x58] sm:$0xff]
        %vm1395 = vcmask 1041409
        %v1396 = vsel %vm1395, %v735, %v728
        %vm1397 = vcmask 1042434
        %v1398 = vsel %vm1397, %v742, %v1396
        %vm1399 = vcmask 1043459
        %v1400 = vsel %vm1399, %v749, %v1398
        %vm1401 = vcmask 1044484
        %v1402 = vsel %vm1401, %v756, %v1400
        %vm1403 = vcmask 1045509
        %v1404 = vsel %vm1403, %v763, %v1402
        %vm1405 = vcmask 1046534
        %v1406 = vsel %vm1405, %v770, %v1404
        %vm1407 = vcmask 1047559
        %v1408 = vsel %vm1407, %v777, %v1406
        %v1409 = vsel %vm1395, %v791, %v784
        %v1410 = vsel %vm1397, %v798, %v1409
        %v1411 = vsel %vm1399, %v805, %v1410
        %v1412 = vsel %vm1401, %v812, %v1411
        %v1413 = vsel %vm1403, %v819, %v1412
        %v1414 = vsel %vm1405, %v826, %v1413
        %v1415 = vsel %vm1407, %v833, %v1414
        %v1416 = vsel %vm568, %v1408, 0
        %v1418 = vsel %vm568, %v1415, 0
        %1420 = vmatpush.msra.mxu0 0.0
        %1421 = vmatpush.msra.mxu0 0.0
        %1422 = vmatpush.msra.mxu0 0.0
        %1423 = vmatpush.msra.mxu0 0.0
        %1424 = vmatpush.msra.mxu0 0.0
        %1425 = vmatpush.msra.mxu0 0.0
        %1426 = vmatpush.msra.mxu0 0.0
        %1427 = vmatpush.msra.mxu0 0.0
        %1428 = vmatpush.msra.mxu0 0.0
        %1429 = vmatpush.msra.mxu0 0.0
        %1430 = vmatpush.msra.mxu0 0.0
        %1431 = vmatpush.msra.mxu0 0.0
        %1432 = vmatpush.msra.mxu0 %v1378
        %1433 = vmatpush.msra.mxu0 %v1377
        %1434 = vmatpush.msra.mxu0 %v1376
        %1435 = vmatpush.msra.mxu0 %v1375
        %1436 = vmatmul.f32.gmra.mxu0 %v1416
        %v1437 = vpop.f32.mrf.mxu0
        %v1438 = vadd.f32 0.0, %v1437
        %1439 = vmatmul.f32.gmra.mxu0 %v1418
        %v1440 = vpop.f32.mrf.mxu0
        %v1441 = vadd.f32 0.0, %v1440
        %1442 = vdwg.mxu0
        %v1443 = vadd.f32 %v1370, %v1438
        %v1444 = vadd.f32 %v1373, %v1441
        %v1445 = vld [vmem:[%s10 + $0x60] sm:$0xff]
        %v1446 = vld [vmem:[%s10 + $0x68] sm:$0xff]
        %v1447 = vld [vmem:[%s10 + $0x70] sm:$0xff]
        %v1448 = vld [vmem:[%s10 + $0x78] sm:$0xff]
        %v1465 = vsel %vm1395, %v1178, %v1169
        %v1466 = vsel %vm1397, %v1187, %v1465
        %v1467 = vsel %vm1399, %v1196, %v1466
        %v1468 = vsel %vm1401, %v1205, %v1467
        %v1469 = vsel %vm1403, %v1214, %v1468
        %v1470 = vsel %vm1405, %v1223, %v1469
        %v1471 = vsel %vm1407, %v1232, %v1470
        %v1472 = vsel %vm1395, %v1250, %v1241
        %v1473 = vsel %vm1397, %v1259, %v1472
        %v1474 = vsel %vm1399, %v1268, %v1473
        %v1475 = vsel %vm1401, %v1277, %v1474
        %v1476 = vsel %vm1403, %v1286, %v1475
        %v1477 = vsel %vm1405, %v1295, %v1476
        %v1478 = vsel %vm1407, %v1304, %v1477
        %v1479 = vsel %vm568, %v1471, 0
        %v1481 = vsel %vm568, %v1478, 0
        %1483 = vmatpush.msra.mxu0 0.0
        %1484 = vmatpush.msra.mxu0 0.0
        %1485 = vmatpush.msra.mxu0 0.0
        %1486 = vmatpush.msra.mxu0 0.0
        %1487 = vmatpush.msra.mxu0 0.0
        %1488 = vmatpush.msra.mxu0 0.0
        %1489 = vmatpush.msra.mxu0 0.0
        %1490 = vmatpush.msra.mxu0 0.0
        %1491 = vmatpush.msra.mxu0 0.0
        %1492 = vmatpush.msra.mxu0 0.0
        %1493 = vmatpush.msra.mxu0 0.0
        %1494 = vmatpush.msra.mxu0 0.0
        %1495 = vmatpush.msra.mxu0 %v1448
        %1496 = vmatpush.msra.mxu0 %v1447
        %1497 = vmatpush.msra.mxu0 %v1446
        %1498 = vmatpush.msra.mxu0 %v1445
        %1499 = vmatmul.f32.gmra.mxu0 %v1479
        %v1500 = vpop.f32.mrf.mxu0
        %v1501 = vadd.f32 0.0, %v1500
        %1502 = vmatmul.f32.gmra.mxu0 %v1481
        %v1503 = vpop.f32.mrf.mxu0
        %v1504 = vadd.f32 0.0, %v1503
        %1505 = vdwg.mxu0
        %v1506 = vadd.f32 %v1443, %v1501
        %v1507 = vadd.f32 %v1444, %v1504
        %v1508 = vld [vmem:[%s11] sm:$0x1]
        %v1510 = vperm.slane %v1508, 0
        %v1512 = vadd.f32 %v1506, %v1510
        %v1513 = vadd.f32 %v1507, %v1510
        %v1514 = vmax.f32 %v1512, 0.0
        %v1515 = vmax.f32 %v1513, 0.0
        %1516 = vst.msk [vmem:[%s527] sm:$0xff] %vm568, %v1514
        %1517 = vst.msk [vmem:[%s527 + $0x8] sm:$0xff] %vm568, %v1515
        %s1518 = sand.u32 %s322, 1
        %s1519 = scalar_lea.sflag [#allocation4], %s1518
        %s1520 = sand.u32 %s322, 1
        %s1521 = smul.addr %s1520, 16
        %s1522 = scalar_lea.vmem [#allocation7], %s1521
        // Predicated region
        $region77: #{tpu_custom_call.1} parent=67 // pred_check
          %p1523 = pneg %p332
        $region78: #{tpu_custom_call.1} parent=67 // pred_check_branch
          %1525 = sbr.rel (%p1523) target = $region80
        $region79: #{tpu_custom_call.1} parent=67 // pred_region
          %1527 = vsyncadd %s1519, 0
          %s1528 = smul.addr %s32, 2
          %s1529 = smul.addr %s1528, 8
          %s1530 = scalar_lea.hbm %s12, %s1529
          %s1531 = sshll.u32 %s1522, 4
          %s1532 = int_to_ptr.vmem [resolvable:$true] %s1531
          %s1533 = sshll.u32 %s1530, 4
          %s1534 = int_to_ptr.hbm [resolvable:$true] %s1533
          %1539 = dma.vmem_to_hbm [thread:$0]  %s1532, 256, %s1534, %s1519, 128, 128, 8
        $region80: #{tpu_custom_call.1} parent=67 // pred_fallthru
          _
      $region68: #{tpu_custom_call.1} parent=5 // pred_fallthru
        _
      %p1540 = scmp.le.s32.totalorder 2, %s27
      // Predicated region
      $region81: #{tpu_custom_call.1} parent=5 // pred_check
        %p1541 = pneg %p1540
      $region82: #{tpu_custom_call.1} parent=5 // pred_check_branch
        %1543 = sbr.rel (%p1541) target = $region84
      $region83: #{tpu_custom_call.1} parent=5 // pred_region
        %s1544 = ssub.s32 %s27, 2
        // Predicated region
        $region85: #{tpu_custom_call.1} parent=83 // pred_check
          %p1545 = pneg %p338
        $region86: #{tpu_custom_call.1} parent=83 // pred_check_branch
          %1547 = sbr.rel (%p1545) target = $region88
        $region87: #{tpu_custom_call.1} parent=83 // pred_region
          %s1548 = sand.u32 %s323, 1
          %s1549 = scalar_lea.sflag [#allocation4], %s1548
          %s1550 = sand.u32 %s323, 1
          %s1551 = smul.addr %s1550, 16
          %s1552 = scalar_lea.vmem [#allocation7], %s1551
          %1554 = dma.done %s1549, 256
        $region88: #{tpu_custom_call.1} parent=83 // pred_fallthru
          _
      $region84: #{tpu_custom_call.1} parent=5 // pred_fallthru
        _
    $region6: #{tpu_custom_call.1} parent=1 // loop_footer
      %s31 = sadd.s32 1, %s27
    $region7: #{tpu_custom_call.1} parent=1 // loop_footer_branch
      %26 = sbr.rel target = $region3
    $region8: #{tpu_custom_call.1} parent=1 // loop_exit
      _
    %1555 = vsyncpa [#allocation3], 1
    %s1556 = scalar_lea.sflag [#allocation3], 1
    %1557 = vsyncpa %s1556, 1
    %1558 = vsyncpa [#allocation6], 1
    %s1559 = scalar_lea.sflag [#allocation6], 1
    %1560 = vsyncpa %s1559, 1
    %1561 = vsyncpa [#allocation4], 1
    %s1562 = scalar_lea.sflag [#allocation4], 1
    %1563 = vsyncpa %s1562, 1

</llo_original>
